<compile_context>
chip_gen: v7x
topology: tpu7x:2x2x1
jax: 0.10.0
libtpu: 0.0.40
codegen_flags: <defaults>
</compile_context>

<pallas_src>
import math
import jax
import jax.numpy as jnp
from jax import lax
from jax.experimental import pallas as pl
from jax.experimental.pallas import tpu as pltpu

# --- model sizes (small, consistent with the module) ---
B = 2          # batch
L = 8          # sequence length
D_MODEL = 32   # d_model
N_HEAD = 4     # nhead
D_FFN = 64     # d_ffn
HEAD_DIM = D_MODEL // N_HEAD
EPS = 1e-6

BL = B * L
ROWS_PER_SLAB = 128 // D_MODEL         # rows of y packed into one 128-lane output row
N_SLABS = BL // ROWS_PER_SLAB          # number of 128-lane output rows
assert 128 % D_MODEL == 0 and BL % ROWS_PER_SLAB == 0
assert B * L * L == 128                # attention map packs into a single (1,128) row

_BF16 = jnp.bfloat16
_F32 = jnp.float32


def _layernorm(x, w, b):
    mu = jnp.mean(x, axis=-1, keepdims=True)
    var = jnp.mean((x - mu) ** 2, axis=-1, keepdims=True)
    return (x - mu) / jnp.sqrt(var + EPS) * w + b


def _rows_to_lanes(m):
    """(R, C) value -> (1, R*C) value, preserving row-major order (lane concat)."""
    r = m.shape[0]
    return jnp.concatenate([m[i:i + 1, :] for i in range(r)], axis=1)


def encoder_layer_kernel(
    x_ref,                                 # (BL, D)      f32
    bias_ref,                              # (BL, BL)     f32  block-diagonal 0 / -1e9
    wqkv_ref, bqkv_ref,                    # (D, 3D) bf16, (1, 3D) f32 (q part pre-scaled)
    wo_ref, bo_ref,                        # (D, D) bf16,  (1, D) f32
    ln1_w_ref, ln1_b_ref,                  # (1, D) f32
    w1_ref, b1_ref,                        # (D, F) bf16,  (1, F) f32
    w2_ref, b2_ref,                        # (F, D) bf16,  (1, D) f32
    ln2_w_ref, ln2_b_ref,                  # (1, D) f32
    out_ref,                               # (N_SLABS, 128) f32  lane-dense packed y
    attn_ref,                              # (1, 128)       f32  lane-dense packed attn
):
    x = x_ref[...]                                                   # (BL, D) f32

    # ---- fused QKV projection: one (BL,D)x(D,3D) bf16 MXU matmul ----------
    qkv = jnp.dot(x.astype(_BF16), wqkv_ref[...],
                  preferred_element_type=_F32) + bqkv_ref[...]       # (BL, 3D) f32
    q = qkv[:, :D_MODEL]
    k = qkv[:, D_MODEL:2 * D_MODEL]
    v = qkv[:, 2 * D_MODEL:]

    # ---- head-batched attention over the fused batch ----------------------
    def heads(t):                                                    # (BL,D)->(H,BL,hd) bf16
        return jnp.stack(
            [t[:, h * HEAD_DIM:(h + 1) * HEAD_DIM] for h in range(N_HEAD)],
            axis=0).astype(_BF16)

    qh, kh, vh = heads(q), heads(k), heads(v)

    # scores already include 1/sqrt(hd) (folded into wq/bq at prep time)
    s = jnp.einsum("hqd,hkd->hqk", qh, kh,
                   preferred_element_type=_F32)                      # (H, BL, BL) f32
    s = s + bias_ref[...][None, :, :]                                # kill cross-batch links
    m = jnp.max(s, axis=-1, keepdims=True)
    e = jnp.exp(s - m)
    p = e / jnp.sum(e, axis=-1, keepdims=True)                       # (H, BL, BL) f32

    ctx_h = jnp.einsum("hqk,hkd->hqd", p.astype(_BF16), vh,
                       preferred_element_type=_F32)                  # (H, BL, hd) f32
    ctx = jnp.concatenate([ctx_h[h] for h in range(N_HEAD)], axis=-1)  # (BL, D)

    # ---- output projection + residual + LayerNorm1 (post-norm) ------------
    mha = jnp.dot(ctx.astype(_BF16), wo_ref[...],
                  preferred_element_type=_F32) + bo_ref[...]
    s1 = _layernorm(x + mha, ln1_w_ref[...], ln1_b_ref[...])

    # ---- positionwise FFN + residual + LayerNorm2 --------------------------
    h1 = jnp.maximum(
        jnp.dot(s1.astype(_BF16), w1_ref[...], preferred_element_type=_F32)
        + b1_ref[...], 0.0)
    ffn_out = jnp.dot(h1.astype(_BF16), w2_ref[...],
                      preferred_element_type=_F32) + b2_ref[...]
    y = _layernorm(s1 + ffn_out, ln2_w_ref[...], ln2_b_ref[...])     # (BL, D)

    # ---- lane-dense (128-wide) unmasked stores -----------------------------
    out_ref[...] = jnp.concatenate(
        [_rows_to_lanes(y[r * ROWS_PER_SLAB:(r + 1) * ROWS_PER_SLAB, :])
         for r in range(N_SLABS)],
        axis=0).astype(out_ref.dtype)                                 # (N_SLABS, 128)

    pm = jnp.mean(p, axis=0)                                          # (BL, BL) head-avg
    attn_ref[...] = jnp.concatenate(
        [_rows_to_lanes(pm[b * L:(b + 1) * L, b * L:(b + 1) * L]) for b in range(B)],
        axis=1).astype(attn_ref.dtype)                                # (1, 128)


def prepare_kernel_params(params):
    """Fuse QKV, fold the 1/sqrt(hd) scale into the q projection, cast matmul
    weights to bf16 (f32 accumulation happens in the kernel)."""
    (wq, wk, wv, bq, bk, bv, wo, bo, ln1_w, ln1_b,
     w1, b1, w2, b2, ln2_w, ln2_b) = params
    scale = 1.0 / math.sqrt(HEAD_DIM)
    wqkv = jnp.concatenate([wq * scale, wk, wv], axis=1).astype(_BF16)   # (D, 3D)
    bqkv = jnp.concatenate([bq * scale, bk, bv], axis=1)                 # (1, 3D) f32
    return (wqkv, bqkv, wo.astype(_BF16), bo, ln1_w, ln1_b,
            w1.astype(_BF16), b1, w2.astype(_BF16), b2, ln2_w, ln2_b)


def transformer_encoder_layer(x, params):
    """x: (B, L, D) float32. Returns (output (B,L,D), attn (B,L,L))."""
    Bq, Lq, Dq = x.shape
    assert (Bq, Lq, Dq) == (B, L, D_MODEL)

    kparams = prepare_kernel_params(params)
    x2d = x.reshape(BL, D_MODEL)

    # additive block-diagonal bias: 0 within the same batch element, -1e9 across
    row_b = jnp.arange(BL) // L
    attn_bias = jnp.where(row_b[:, None] == row_b[None, :], 0.0, -1e9).astype(_F32)

    def full(a):
        return pl.BlockSpec(a.shape, lambda i: (0,) * a.ndim)

    in_args = (x2d, attn_bias) + kparams
    in_specs = [full(a) for a in in_args]
    out_specs = [
        pl.BlockSpec((N_SLABS, 128), lambda i: (0, 0)),
        pl.BlockSpec((1, 128), lambda i: (0, 0)),
    ]
    out_shape = [
        jax.ShapeDtypeStruct((N_SLABS, 128), jnp.float32),
        jax.ShapeDtypeStruct((1, 128), jnp.float32),
    ]

    fn = pl.pallas_call(
        encoder_layer_kernel,
        out_shape=out_shape,
        grid_spec=pltpu.PrefetchScalarGridSpec(
            num_scalar_prefetch=0,
            grid=(1,),                       # single invocation for the whole batch
            in_specs=in_specs,
            out_specs=out_specs,
        ),
        compiler_params=pltpu.CompilerParams(dimension_semantics=("arbitrary",)),
    )
    out128, attn128 = fn(*in_args)
    return out128.reshape(B, L, D_MODEL), attn128.reshape(B, L, L)


def make_params(key):
    """Deterministic synthetic parameters, stored pre-transposed for x @ W."""
    ks = jax.random.split(key, 16)
    def w(k, shape, scale):
        return jax.random.normal(k, shape, jnp.float32) * scale
    wq = w(ks[0], (D_MODEL, D_MODEL), 1.0 / math.sqrt(D_MODEL))
    wk = w(ks[1], (D_MODEL, D_MODEL), 1.0 / math.sqrt(D_MODEL))
    wv = w(ks[2], (D_MODEL, D_MODEL), 1.0 / math.sqrt(D_MODEL))
    bq = w(ks[3], (1, D_MODEL), 0.02)
    bk = w(ks[4], (1, D_MODEL), 0.02)
    bv = w(ks[5], (1, D_MODEL), 0.02)
    wo = w(ks[6], (D_MODEL, D_MODEL), 1.0 / math.sqrt(D_MODEL))
    bo = w(ks[7], (1, D_MODEL), 0.02)
    ln1_w = 1.0 + w(ks[12], (1, D_MODEL), 0.1)
    ln1_b = w(ks[13], (1, D_MODEL), 0.02)
    w1 = w(ks[8], (D_MODEL, D_FFN), 1.0 / math.sqrt(D_MODEL))
    b1 = w(ks[9], (1, D_FFN), 0.02)
    w2 = w(ks[10], (D_FFN, D_MODEL), 1.0 / math.sqrt(D_FFN))
    b2 = w(ks[11], (1, D_MODEL), 0.02)
    ln2_w = 1.0 + w(ks[14], (1, D_MODEL), 0.1)
    ln2_b = w(ks[15], (1, D_MODEL), 0.02)
    return (wq, wk, wv, bq, bk, bv, wo, bo, ln1_w, ln1_b,
            w1, b1, w2, b2, ln2_w, ln2_b)


def reference(x, params):
    """Pure-JAX reference matching the torch module semantics (dropout=0, eval),
    with the same bf16-operand / f32-accumulation matmuls and the same
    scale-folding as the kernel (mathematically identical to scores/sqrt(hd))."""
    (wq, wk, wv, bq, bk, bv, wo, bo, ln1_w, ln1_b,
     w1, b1, w2, b2, ln2_w, ln2_b) = params
    scale = 1.0 / math.sqrt(HEAD_DIM)
    xb = x.astype(_BF16)
    q = jnp.einsum("bld,de->ble", xb, (wq * scale).astype(_BF16),
                   preferred_element_type=_F32) + bq * scale
    k = jnp.einsum("bld,de->ble", xb, wk.astype(_BF16),
                   preferred_element_type=_F32) + bk
    v = jnp.einsum("bld,de->ble", xb, wv.astype(_BF16),
                   preferred_element_type=_F32) + bv
    def split(t):
        return t.reshape(B, L, N_HEAD, HEAD_DIM).transpose(0, 2, 1, 3)
    qh, kh, vh = split(q).astype(_BF16), split(k).astype(_BF16), split(v).astype(_BF16)
    s = jnp.einsum("bhld,bhsd->bhls", qh, kh, preferred_element_type=_F32)
    p = jax.nn.softmax(s, axis=-1)
    ctx = jnp.einsum("bhls,bhsd->bhld", p.astype(_BF16), vh,
                     preferred_element_type=_F32)
    ctx = ctx.transpose(0, 2, 1, 3).reshape(B, L, D_MODEL)
    mha = jnp.einsum("bld,de->ble", ctx.astype(_BF16), wo.astype(_BF16),
                     preferred_element_type=_F32) + bo
    attn = jnp.mean(p, axis=1)
    s1 = _layernorm(x + mha, ln1_w, ln1_b)
    h = jax.nn.relu(jnp.einsum("bld,df->blf", s1.astype(_BF16), w1.astype(_BF16),
                               preferred_element_type=_F32) + b1)
    f = jnp.einsum("blf,fd->bld", h.astype(_BF16), w2.astype(_BF16),
                   preferred_element_type=_F32) + b2
    y = _layernorm(s1 + f, ln2_w, ln2_b)
    return y, attn


if __name__ == "__main__":
    key = jax.random.PRNGKey(0)
    k_x, k_p = jax.random.split(key)
    x = jax.random.normal(k_x, (B, L, D_MODEL), jnp.float32)
    params = make_params(k_p)

    out, attn = transformer_encoder_layer(x, params)
    out = jax.block_until_ready(out)
    attn = jax.block_until_ready(attn)

    ref_out, ref_attn = reference(x, params)
    assert out.shape == (B, L, D_MODEL) and attn.shape == (B, L, L)
    # bf16 matmul inputs (f32 accumulation) on both sides -> 2e-3 tolerance
    assert jnp.allclose(out, ref_out, atol=2e-3, rtol=2e-3)
    assert jnp.allclose(attn, ref_attn, atol=2e-3, rtol=2e-3)
    print("KERNEL_OK")
</pallas_src>

<mosaic_0001>
module attributes {stable_mosaic.version = 11 : i64} {
  func.func @encoder_layer_kernel(%arg0: i32, %arg1: memref<16x32xf32, #tpu.memory_space<vmem>>, %arg2: memref<16x16xf32, #tpu.memory_space<vmem>>, %arg3: memref<32x96xbf16, #tpu.memory_space<vmem>>, %arg4: memref<1x96xf32, #tpu.memory_space<vmem>>, %arg5: memref<32x32xbf16, #tpu.memory_space<vmem>>, %arg6: memref<1x32xf32, #tpu.memory_space<vmem>>, %arg7: memref<1x32xf32, #tpu.memory_space<vmem>>, %arg8: memref<1x32xf32, #tpu.memory_space<vmem>>, %arg9: memref<32x64xbf16, #tpu.memory_space<vmem>>, %arg10: memref<1x64xf32, #tpu.memory_space<vmem>>, %arg11: memref<64x32xbf16, #tpu.memory_space<vmem>>, %arg12: memref<1x32xf32, #tpu.memory_space<vmem>>, %arg13: memref<1x32xf32, #tpu.memory_space<vmem>>, %arg14: memref<1x32xf32, #tpu.memory_space<vmem>>, %arg15: memref<4x128xf32, #tpu.memory_space<vmem>>, %arg16: memref<1x128xf32, #tpu.memory_space<vmem>>) attributes {dimension_semantics = [#tpu.dimension_semantics<arbitrary>], iteration_bounds = array<i64: 1>, scalar_prefetch = 0 : i64, scratch_operands = 0 : i64, tpu.core_type = #tpu.core_type<tc>, window_params = [{pipeline_mode = #tpu.pipeline_mode<synchronous>, transform_indices = @transform_0, window_bounds = array<i64: 16, 32>}, {pipeline_mode = #tpu.pipeline_mode<synchronous>, transform_indices = @transform_1, window_bounds = array<i64: 16, 16>}, {pipeline_mode = #tpu.pipeline_mode<synchronous>, transform_indices = @transform_2, window_bounds = array<i64: 32, 96>}, {pipeline_mode = #tpu.pipeline_mode<synchronous>, transform_indices = @transform_3, window_bounds = array<i64: 1, 96>}, {pipeline_mode = #tpu.pipeline_mode<synchronous>, transform_indices = @transform_4, window_bounds = array<i64: 32, 32>}, {pipeline_mode = #tpu.pipeline_mode<synchronous>, transform_indices = @transform_5, window_bounds = array<i64: 1, 32>}, {pipeline_mode = #tpu.pipeline_mode<synchronous>, transform_indices = @transform_6, window_bounds = array<i64: 1, 32>}, {pipeline_mode = #tpu.pipeline_mode<synchronous>, transform_indices = @transform_7, window_bounds = array<i64: 1, 32>}, {pipeline_mode = #tpu.pipeline_mode<synchronous>, transform_indices = @transform_8, window_bounds = array<i64: 32, 64>}, {pipeline_mode = #tpu.pipeline_mode<synchronous>, transform_indices = @transform_9, window_bounds = array<i64: 1, 64>}, {pipeline_mode = #tpu.pipeline_mode<synchronous>, transform_indices = @transform_10, window_bounds = array<i64: 64, 32>}, {pipeline_mode = #tpu.pipeline_mode<synchronous>, transform_indices = @transform_11, window_bounds = array<i64: 1, 32>}, {pipeline_mode = #tpu.pipeline_mode<synchronous>, transform_indices = @transform_12, window_bounds = array<i64: 1, 32>}, {pipeline_mode = #tpu.pipeline_mode<synchronous>, transform_indices = @transform_13, window_bounds = array<i64: 1, 32>}, {pipeline_mode = #tpu.pipeline_mode<synchronous>, transform_indices = @transform_14, window_bounds = array<i64: 4, 128>}, {pipeline_mode = #tpu.pipeline_mode<synchronous>, transform_indices = @transform_15, window_bounds = array<i64: 1, 128>}]} {
    %c0 = arith.constant 0 : index
    %c0_0 = arith.constant 0 : index
    %0 = vector.load %arg1[%c0, %c0_0] : memref<16x32xf32, #tpu.memory_space<vmem>>, vector<16x32xf32>
    %1 = arith.truncf %0 : vector<16x32xf32> to vector<16x32xbf16>
    %c0_1 = arith.constant 0 : index
    %c0_2 = arith.constant 0 : index
    %2 = vector.load %arg3[%c0_1, %c0_2] : memref<32x96xbf16, #tpu.memory_space<vmem>>, vector<32x96xbf16>
    %cst = arith.constant dense<0.000000e+00> : vector<16x96xf32>
    %3 = tpu.matmul %1, %2, %cst {dimension_numbers = #tpu.dot_dimension_numbers<[1], [0], [0], [1], [0, 0, 1, 1], [], []>} : vector<16x32xbf16>, vector<32x96xbf16>, vector<16x96xf32> -> vector<16x96xf32>
    %c0_3 = arith.constant 0 : index
    %c0_4 = arith.constant 0 : index
    %4 = vector.load %arg4[%c0_3, %c0_4] : memref<1x96xf32, #tpu.memory_space<vmem>>, vector<1x96xf32>
    %5 = vector.broadcast %4 : vector<1x96xf32> to vector<16x96xf32>
    %6 = arith.addf %3, %5 : vector<16x96xf32>
    %7 = vector.extract_strided_slice %6 {offsets = [0, 0], sizes = [16, 32], strides = [1, 1]} : vector<16x96xf32> to vector<16x32xf32>
    %8 = vector.extract_strided_slice %6 {offsets = [0, 32], sizes = [16, 32], strides = [1, 1]} : vector<16x96xf32> to vector<16x32xf32>
    %9 = vector.extract_strided_slice %6 {offsets = [0, 64], sizes = [16, 32], strides = [1, 1]} : vector<16x96xf32> to vector<16x32xf32>
    %10 = vector.extract_strided_slice %7 {offsets = [0, 0], sizes = [16, 8], strides = [1, 1]} : vector<16x32xf32> to vector<16x8xf32>
    %11 = vector.extract_strided_slice %7 {offsets = [0, 8], sizes = [16, 8], strides = [1, 1]} : vector<16x32xf32> to vector<16x8xf32>
    %12 = vector.extract_strided_slice %7 {offsets = [0, 16], sizes = [16, 8], strides = [1, 1]} : vector<16x32xf32> to vector<16x8xf32>
    %13 = vector.extract_strided_slice %7 {offsets = [0, 24], sizes = [16, 8], strides = [1, 1]} : vector<16x32xf32> to vector<16x8xf32>
    %14 = vector.shape_cast %10 : vector<16x8xf32> to vector<1x16x8xf32>
    %15 = vector.shape_cast %11 : vector<16x8xf32> to vector<1x16x8xf32>
    %16 = vector.shape_cast %12 : vector<16x8xf32> to vector<1x16x8xf32>
    %17 = vector.shape_cast %13 : vector<16x8xf32> to vector<1x16x8xf32>
    %18 = tpu.concatenate %14, %15, %16, %17 in 0 : vector<1x16x8xf32>, vector<1x16x8xf32>, vector<1x16x8xf32>, vector<1x16x8xf32> -> vector<4x16x8xf32>
    %19 = arith.truncf %18 : vector<4x16x8xf32> to vector<4x16x8xbf16>
    %20 = vector.extract_strided_slice %8 {offsets = [0, 0], sizes = [16, 8], strides = [1, 1]} : vector<16x32xf32> to vector<16x8xf32>
    %21 = vector.extract_strided_slice %8 {offsets = [0, 8], sizes = [16, 8], strides = [1, 1]} : vector<16x32xf32> to vector<16x8xf32>
    %22 = vector.extract_strided_slice %8 {offsets = [0, 16], sizes = [16, 8], strides = [1, 1]} : vector<16x32xf32> to vector<16x8xf32>
    %23 = vector.extract_strided_slice %8 {offsets = [0, 24], sizes = [16, 8], strides = [1, 1]} : vector<16x32xf32> to vector<16x8xf32>
    %24 = vector.shape_cast %20 : vector<16x8xf32> to vector<1x16x8xf32>
    %25 = vector.shape_cast %21 : vector<16x8xf32> to vector<1x16x8xf32>
    %26 = vector.shape_cast %22 : vector<16x8xf32> to vector<1x16x8xf32>
    %27 = vector.shape_cast %23 : vector<16x8xf32> to vector<1x16x8xf32>
    %28 = tpu.concatenate %24, %25, %26, %27 in 0 : vector<1x16x8xf32>, vector<1x16x8xf32>, vector<1x16x8xf32>, vector<1x16x8xf32> -> vector<4x16x8xf32>
    %29 = arith.truncf %28 : vector<4x16x8xf32> to vector<4x16x8xbf16>
    %30 = vector.extract_strided_slice %9 {offsets = [0, 0], sizes = [16, 8], strides = [1, 1]} : vector<16x32xf32> to vector<16x8xf32>
    %31 = vector.extract_strided_slice %9 {offsets = [0, 8], sizes = [16, 8], strides = [1, 1]} : vector<16x32xf32> to vector<16x8xf32>
    %32 = vector.extract_strided_slice %9 {offsets = [0, 16], sizes = [16, 8], strides = [1, 1]} : vector<16x32xf32> to vector<16x8xf32>
    %33 = vector.extract_strided_slice %9 {offsets = [0, 24], sizes = [16, 8], strides = [1, 1]} : vector<16x32xf32> to vector<16x8xf32>
    %34 = vector.shape_cast %30 : vector<16x8xf32> to vector<1x16x8xf32>
    %35 = vector.shape_cast %31 : vector<16x8xf32> to vector<1x16x8xf32>
    %36 = vector.shape_cast %32 : vector<16x8xf32> to vector<1x16x8xf32>
    %37 = vector.shape_cast %33 : vector<16x8xf32> to vector<1x16x8xf32>
    %38 = tpu.concatenate %34, %35, %36, %37 in 0 : vector<1x16x8xf32>, vector<1x16x8xf32>, vector<1x16x8xf32>, vector<1x16x8xf32> -> vector<4x16x8xf32>
    %39 = arith.truncf %38 : vector<4x16x8xf32> to vector<4x16x8xbf16>
    "tpu.trace_start"() <{level = 10 : i32, message = "hqd,hkd->hqk"}> : () -> ()
    %cst_5 = arith.constant dense<0.000000e+00> : vector<4x16x16xf32>
    %40 = tpu.matmul %19, %29, %cst_5 {dimension_numbers = #tpu.dot_dimension_numbers<[2], [2], [1], [1], [0, 0, 0, 1, 1, 1], [0], [0]>} : vector<4x16x8xbf16>, vector<4x16x8xbf16>, vector<4x16x16xf32> -> vector<4x16x16xf32>
    "tpu.trace_stop"() : () -> ()
    %c0_6 = arith.constant 0 : index
    %c0_7 = arith.constant 0 : index
    %41 = vector.load %arg2[%c0_6, %c0_7] : memref<16x16xf32, #tpu.memory_space<vmem>>, vector<16x16xf32>
    %42 = vector.shape_cast %41 : vector<16x16xf32> to vector<1x16x16xf32>
    %43 = vector.broadcast %42 : vector<1x16x16xf32> to vector<4x16x16xf32>
    %44 = arith.addf %40, %43 : vector<4x16x16xf32>
    %cst_8 = arith.constant dense<0xFF800000> : vector<4x16xf32>
    %45 = vector.multi_reduction <maximumf>, %44, %cst_8 [2] : vector<4x16x16xf32> to vector<4x16xf32>
    %46 = vector.shape_cast %45 : vector<4x16xf32> to vector<4x16x1xf32>
    %47 = vector.broadcast %46 : vector<4x16x1xf32> to vector<4x16x16xf32>
    %48 = arith.subf %44, %47 : vector<4x16x16xf32>
    %49 = math.exp %48 : vector<4x16x16xf32>
    %cst_9 = arith.constant dense<0.000000e+00> : vector<4x16xf32>
    %50 = vector.multi_reduction <add>, %49, %cst_9 [2] : vector<4x16x16xf32> to vector<4x16xf32>
    %51 = vector.shape_cast %50 : vector<4x16xf32> to vector<4x16x1xf32>
    %52 = vector.broadcast %51 : vector<4x16x1xf32> to vector<4x16x16xf32>
    %53 = arith.divf %49, %52 : vector<4x16x16xf32>
    %54 = arith.truncf %53 : vector<4x16x16xf32> to vector<4x16x16xbf16>
    "tpu.trace_start"() <{level = 10 : i32, message = "hqk,hkd->hqd"}> : () -> ()
    %cst_10 = arith.constant dense<0.000000e+00> : vector<4x16x8xf32>
    %55 = tpu.matmul %54, %39, %cst_10 {dimension_numbers = #tpu.dot_dimension_numbers<[2], [1], [1], [2], [0, 0, 0, 1, 1, 2], [0], [0]>} : vector<4x16x16xbf16>, vector<4x16x8xbf16>, vector<4x16x8xf32> -> vector<4x16x8xf32>
    "tpu.trace_stop"() : () -> ()
    %56 = vector.extract_strided_slice %55 {offsets = [0, 0, 0], sizes = [1, 16, 8], strides = [1, 1, 1]} : vector<4x16x8xf32> to vector<1x16x8xf32>
    %57 = vector.shape_cast %56 : vector<1x16x8xf32> to vector<16x8xf32>
    %58 = vector.extract_strided_slice %55 {offsets = [1, 0, 0], sizes = [1, 16, 8], strides = [1, 1, 1]} : vector<4x16x8xf32> to vector<1x16x8xf32>
    %59 = vector.shape_cast %58 : vector<1x16x8xf32> to vector<16x8xf32>
    %60 = vector.extract_strided_slice %55 {offsets = [2, 0, 0], sizes = [1, 16, 8], strides = [1, 1, 1]} : vector<4x16x8xf32> to vector<1x16x8xf32>
    %61 = vector.shape_cast %60 : vector<1x16x8xf32> to vector<16x8xf32>
    %62 = vector.extract_strided_slice %55 {offsets = [3, 0, 0], sizes = [1, 16, 8], strides = [1, 1, 1]} : vector<4x16x8xf32> to vector<1x16x8xf32>
    %63 = vector.shape_cast %62 : vector<1x16x8xf32> to vector<16x8xf32>
    %64 = tpu.concatenate %57, %59, %61, %63 in 1 : vector<16x8xf32>, vector<16x8xf32>, vector<16x8xf32>, vector<16x8xf32> -> vector<16x32xf32>
    %65 = arith.truncf %64 : vector<16x32xf32> to vector<16x32xbf16>
    %c0_11 = arith.constant 0 : index
    %c0_12 = arith.constant 0 : index
    %66 = vector.load %arg5[%c0_11, %c0_12] : memref<32x32xbf16, #tpu.memory_space<vmem>>, vector<32x32xbf16>
    %cst_13 = arith.constant dense<0.000000e+00> : vector<16x32xf32>
    %67 = tpu.matmul %65, %66, %cst_13 {dimension_numbers = #tpu.dot_dimension_numbers<[1], [0], [0], [1], [0, 0, 1, 1], [], []>} : vector<16x32xbf16>, vector<32x32xbf16>, vector<16x32xf32> -> vector<16x32xf32>
    %c0_14 = arith.constant 0 : index
    %c0_15 = arith.constant 0 : index
    %68 = vector.load %arg6[%c0_14, %c0_15] : memref<1x32xf32, #tpu.memory_space<vmem>>, vector<1x32xf32>
    %69 = vector.broadcast %68 : vector<1x32xf32> to vector<16x32xf32>
    %70 = arith.addf %67, %69 : vector<16x32xf32>
    %71 = arith.addf %0, %70 : vector<16x32xf32>
    %c0_16 = arith.constant 0 : index
    %c0_17 = arith.constant 0 : index
    %72 = vector.load %arg7[%c0_16, %c0_17] : memref<1x32xf32, #tpu.memory_space<vmem>>, vector<1x32xf32>
    %c0_18 = arith.constant 0 : index
    %c0_19 = arith.constant 0 : index
    %73 = vector.load %arg8[%c0_18, %c0_19] : memref<1x32xf32, #tpu.memory_space<vmem>>, vector<1x32xf32>
    %cst_20 = arith.constant dense<0.000000e+00> : vector<16xf32>
    %74 = vector.multi_reduction <add>, %71, %cst_20 [1] : vector<16x32xf32> to vector<16xf32>
    %75 = vector.shape_cast %74 : vector<16xf32> to vector<16x1xf32>
    %cst_21 = arith.constant 3.200000e+01 : f32
    %76 = vector.broadcast %cst_21 : f32 to vector<16x1xf32>
    %77 = arith.divf %75, %76 : vector<16x1xf32>
    %78 = vector.broadcast %77 : vector<16x1xf32> to vector<16x32xf32>
    %79 = arith.subf %71, %78 : vector<16x32xf32>
    %80 = arith.mulf %79, %79 : vector<16x32xf32>
    %cst_22 = arith.constant dense<0.000000e+00> : vector<16xf32>
    %81 = vector.multi_reduction <add>, %80, %cst_22 [1] : vector<16x32xf32> to vector<16xf32>
    %82 = vector.shape_cast %81 : vector<16xf32> to vector<16x1xf32>
    %cst_23 = arith.constant 3.200000e+01 : f32
    %83 = vector.broadcast %cst_23 : f32 to vector<16x1xf32>
    %84 = arith.divf %82, %83 : vector<16x1xf32>
    %85 = vector.broadcast %77 : vector<16x1xf32> to vector<16x32xf32>
    %86 = arith.subf %71, %85 : vector<16x32xf32>
    %cst_24 = arith.constant 9.99999997E-7 : f32
    %87 = vector.broadcast %cst_24 : f32 to vector<16x1xf32>
    %88 = arith.addf %84, %87 : vector<16x1xf32>
    %89 = math.sqrt %88 : vector<16x1xf32>
    %90 = vector.broadcast %89 : vector<16x1xf32> to vector<16x32xf32>
    %91 = arith.divf %86, %90 : vector<16x32xf32>
    %92 = vector.broadcast %72 : vector<1x32xf32> to vector<16x32xf32>
    %93 = arith.mulf %91, %92 : vector<16x32xf32>
    %94 = vector.broadcast %73 : vector<1x32xf32> to vector<16x32xf32>
    %95 = arith.addf %93, %94 : vector<16x32xf32>
    %96 = arith.truncf %95 : vector<16x32xf32> to vector<16x32xbf16>
    %c0_25 = arith.constant 0 : index
    %c0_26 = arith.constant 0 : index
    %97 = vector.load %arg9[%c0_25, %c0_26] : memref<32x64xbf16, #tpu.memory_space<vmem>>, vector<32x64xbf16>
    %cst_27 = arith.constant dense<0.000000e+00> : vector<16x64xf32>
    %98 = tpu.matmul %96, %97, %cst_27 {dimension_numbers = #tpu.dot_dimension_numbers<[1], [0], [0], [1], [0, 0, 1, 1], [], []>} : vector<16x32xbf16>, vector<32x64xbf16>, vector<16x64xf32> -> vector<16x64xf32>
    %c0_28 = arith.constant 0 : index
    %c0_29 = arith.constant 0 : index
    %99 = vector.load %arg10[%c0_28, %c0_29] : memref<1x64xf32, #tpu.memory_space<vmem>>, vector<1x64xf32>
    %100 = vector.broadcast %99 : vector<1x64xf32> to vector<16x64xf32>
    %101 = arith.addf %98, %100 : vector<16x64xf32>
    %cst_30 = arith.constant 0.000000e+00 : f32
    %102 = vector.broadcast %cst_30 : f32 to vector<16x64xf32>
    %103 = arith.maximumf %101, %102 : vector<16x64xf32>
    %104 = arith.truncf %103 : vector<16x64xf32> to vector<16x64xbf16>
    %c0_31 = arith.constant 0 : index
    %c0_32 = arith.constant 0 : index
    %105 = vector.load %arg11[%c0_31, %c0_32] : memref<64x32xbf16, #tpu.memory_space<vmem>>, vector<64x32xbf16>
    %cst_33 = arith.constant dense<0.000000e+00> : vector<16x32xf32>
    %106 = tpu.matmul %104, %105, %cst_33 {dimension_numbers = #tpu.dot_dimension_numbers<[1], [0], [0], [1], [0, 0, 1, 1], [], []>} : vector<16x64xbf16>, vector<64x32xbf16>, vector<16x32xf32> -> vector<16x32xf32>
    %c0_34 = arith.constant 0 : index
    %c0_35 = arith.constant 0 : index
    %107 = vector.load %arg12[%c0_34, %c0_35] : memref<1x32xf32, #tpu.memory_space<vmem>>, vector<1x32xf32>
    %108 = vector.broadcast %107 : vector<1x32xf32> to vector<16x32xf32>
    %109 = arith.addf %106, %108 : vector<16x32xf32>
    %110 = arith.addf %95, %109 : vector<16x32xf32>
    %c0_36 = arith.constant 0 : index
    %c0_37 = arith.constant 0 : index
    %111 = vector.load %arg13[%c0_36, %c0_37] : memref<1x32xf32, #tpu.memory_space<vmem>>, vector<1x32xf32>
    %c0_38 = arith.constant 0 : index
    %c0_39 = arith.constant 0 : index
    %112 = vector.load %arg14[%c0_38, %c0_39] : memref<1x32xf32, #tpu.memory_space<vmem>>, vector<1x32xf32>
    %cst_40 = arith.constant dense<0.000000e+00> : vector<16xf32>
    %113 = vector.multi_reduction <add>, %110, %cst_40 [1] : vector<16x32xf32> to vector<16xf32>
    %114 = vector.shape_cast %113 : vector<16xf32> to vector<16x1xf32>
    %cst_41 = arith.constant 3.200000e+01 : f32
    %115 = vector.broadcast %cst_41 : f32 to vector<16x1xf32>
    %116 = arith.divf %114, %115 : vector<16x1xf32>
    %117 = vector.broadcast %116 : vector<16x1xf32> to vector<16x32xf32>
    %118 = arith.subf %110, %117 : vector<16x32xf32>
    %119 = arith.mulf %118, %118 : vector<16x32xf32>
    %cst_42 = arith.constant dense<0.000000e+00> : vector<16xf32>
    %120 = vector.multi_reduction <add>, %119, %cst_42 [1] : vector<16x32xf32> to vector<16xf32>
    %121 = vector.shape_cast %120 : vector<16xf32> to vector<16x1xf32>
    %cst_43 = arith.constant 3.200000e+01 : f32
    %122 = vector.broadcast %cst_43 : f32 to vector<16x1xf32>
    %123 = arith.divf %121, %122 : vector<16x1xf32>
    %124 = vector.broadcast %116 : vector<16x1xf32> to vector<16x32xf32>
    %125 = arith.subf %110, %124 : vector<16x32xf32>
    %cst_44 = arith.constant 9.99999997E-7 : f32
    %126 = vector.broadcast %cst_44 : f32 to vector<16x1xf32>
    %127 = arith.addf %123, %126 : vector<16x1xf32>
    %128 = math.sqrt %127 : vector<16x1xf32>
    %129 = vector.broadcast %128 : vector<16x1xf32> to vector<16x32xf32>
    %130 = arith.divf %125, %129 : vector<16x32xf32>
    %131 = vector.broadcast %111 : vector<1x32xf32> to vector<16x32xf32>
    %132 = arith.mulf %130, %131 : vector<16x32xf32>
    %133 = vector.broadcast %112 : vector<1x32xf32> to vector<16x32xf32>
    %134 = arith.addf %132, %133 : vector<16x32xf32>
    %135 = vector.extract_strided_slice %134 {offsets = [0, 0], sizes = [4, 32], strides = [1, 1]} : vector<16x32xf32> to vector<4x32xf32>
    %136 = vector.extract_strided_slice %135 {offsets = [0, 0], sizes = [1, 32], strides = [1, 1]} : vector<4x32xf32> to vector<1x32xf32>
    %137 = vector.extract_strided_slice %135 {offsets = [1, 0], sizes = [1, 32], strides = [1, 1]} : vector<4x32xf32> to vector<1x32xf32>
    %138 = vector.extract_strided_slice %135 {offsets = [2, 0], sizes = [1, 32], strides = [1, 1]} : vector<4x32xf32> to vector<1x32xf32>
    %139 = vector.extract_strided_slice %135 {offsets = [3, 0], sizes = [1, 32], strides = [1, 1]} : vector<4x32xf32> to vector<1x32xf32>
    %140 = tpu.concatenate %136, %137, %138, %139 in 1 : vector<1x32xf32>, vector<1x32xf32>, vector<1x32xf32>, vector<1x32xf32> -> vector<1x128xf32>
    %141 = vector.extract_strided_slice %134 {offsets = [4, 0], sizes = [4, 32], strides = [1, 1]} : vector<16x32xf32> to vector<4x32xf32>
    %142 = vector.extract_strided_slice %141 {offsets = [0, 0], sizes = [1, 32], strides = [1, 1]} : vector<4x32xf32> to vector<1x32xf32>
    %143 = vector.extract_strided_slice %141 {offsets = [1, 0], sizes = [1, 32], strides = [1, 1]} : vector<4x32xf32> to vector<1x32xf32>
    %144 = vector.extract_strided_slice %141 {offsets = [2, 0], sizes = [1, 32], strides = [1, 1]} : vector<4x32xf32> to vector<1x32xf32>
    %145 = vector.extract_strided_slice %141 {offsets = [3, 0], sizes = [1, 32], strides = [1, 1]} : vector<4x32xf32> to vector<1x32xf32>
    %146 = tpu.concatenate %142, %143, %144, %145 in 1 : vector<1x32xf32>, vector<1x32xf32>, vector<1x32xf32>, vector<1x32xf32> -> vector<1x128xf32>
    %147 = vector.extract_strided_slice %134 {offsets = [8, 0], sizes = [4, 32], strides = [1, 1]} : vector<16x32xf32> to vector<4x32xf32>
    %148 = vector.extract_strided_slice %147 {offsets = [0, 0], sizes = [1, 32], strides = [1, 1]} : vector<4x32xf32> to vector<1x32xf32>
    %149 = vector.extract_strided_slice %147 {offsets = [1, 0], sizes = [1, 32], strides = [1, 1]} : vector<4x32xf32> to vector<1x32xf32>
    %150 = vector.extract_strided_slice %147 {offsets = [2, 0], sizes = [1, 32], strides = [1, 1]} : vector<4x32xf32> to vector<1x32xf32>
    %151 = vector.extract_strided_slice %147 {offsets = [3, 0], sizes = [1, 32], strides = [1, 1]} : vector<4x32xf32> to vector<1x32xf32>
    %152 = tpu.concatenate %148, %149, %150, %151 in 1 : vector<1x32xf32>, vector<1x32xf32>, vector<1x32xf32>, vector<1x32xf32> -> vector<1x128xf32>
    %153 = vector.extract_strided_slice %134 {offsets = [12, 0], sizes = [4, 32], strides = [1, 1]} : vector<16x32xf32> to vector<4x32xf32>
    %154 = vector.extract_strided_slice %153 {offsets = [0, 0], sizes = [1, 32], strides = [1, 1]} : vector<4x32xf32> to vector<1x32xf32>
    %155 = vector.extract_strided_slice %153 {offsets = [1, 0], sizes = [1, 32], strides = [1, 1]} : vector<4x32xf32> to vector<1x32xf32>
    %156 = vector.extract_strided_slice %153 {offsets = [2, 0], sizes = [1, 32], strides = [1, 1]} : vector<4x32xf32> to vector<1x32xf32>
    %157 = vector.extract_strided_slice %153 {offsets = [3, 0], sizes = [1, 32], strides = [1, 1]} : vector<4x32xf32> to vector<1x32xf32>
    %158 = tpu.concatenate %154, %155, %156, %157 in 1 : vector<1x32xf32>, vector<1x32xf32>, vector<1x32xf32>, vector<1x32xf32> -> vector<1x128xf32>
    %159 = tpu.concatenate %140, %146, %152, %158 in 0 : vector<1x128xf32>, vector<1x128xf32>, vector<1x128xf32>, vector<1x128xf32> -> vector<4x128xf32>
    %c0_45 = arith.constant 0 : index
    %c0_46 = arith.constant 0 : index
    %160 = vector.load %arg15[%c0_45, %c0_46] : memref<4x128xf32, #tpu.memory_space<vmem>>, vector<4x128xf32>
    tpu.vector_store %arg15[%c0_45, %c0_46], %159 {strides = array<i32>} : memref<4x128xf32, #tpu.memory_space<vmem>>, vector<4x128xf32>,
    %cst_47 = arith.constant dense<0.000000e+00> : vector<16x16xf32>
    %161 = vector.multi_reduction <add>, %53, %cst_47 [0] : vector<4x16x16xf32> to vector<16x16xf32>
    %cst_48 = arith.constant 4.000000e+00 : f32
    %162 = vector.broadcast %cst_48 : f32 to vector<16x16xf32>
    %163 = arith.divf %161, %162 : vector<16x16xf32>
    %164 = vector.extract_strided_slice %163 {offsets = [0, 0], sizes = [8, 8], strides = [1, 1]} : vector<16x16xf32> to vector<8x8xf32>
    %165 = vector.extract_strided_slice %164 {offsets = [0, 0], sizes = [1, 8], strides = [1, 1]} : vector<8x8xf32> to vector<1x8xf32>
    %166 = vector.extract_strided_slice %164 {offsets = [1, 0], sizes = [1, 8], strides = [1, 1]} : vector<8x8xf32> to vector<1x8xf32>
    %167 = vector.extract_strided_slice %164 {offsets = [2, 0], sizes = [1, 8], strides = [1, 1]} : vector<8x8xf32> to vector<1x8xf32>
    %168 = vector.extract_strided_slice %164 {offsets = [3, 0], sizes = [1, 8], strides = [1, 1]} : vector<8x8xf32> to vector<1x8xf32>
    %169 = vector.extract_strided_slice %164 {offsets = [4, 0], sizes = [1, 8], strides = [1, 1]} : vector<8x8xf32> to vector<1x8xf32>
    %170 = vector.extract_strided_slice %164 {offsets = [5, 0], sizes = [1, 8], strides = [1, 1]} : vector<8x8xf32> to vector<1x8xf32>
    %171 = vector.extract_strided_slice %164 {offsets = [6, 0], sizes = [1, 8], strides = [1, 1]} : vector<8x8xf32> to vector<1x8xf32>
    %172 = vector.extract_strided_slice %164 {offsets = [7, 0], sizes = [1, 8], strides = [1, 1]} : vector<8x8xf32> to vector<1x8xf32>
    %173 = tpu.concatenate %165, %166, %167, %168, %169, %170, %171, %172 in 1 : vector<1x8xf32>, vector<1x8xf32>, vector<1x8xf32>, vector<1x8xf32>, vector<1x8xf32>, vector<1x8xf32>, vector<1x8xf32>, vector<1x8xf32> -> vector<1x64xf32>
    %174 = vector.extract_strided_slice %163 {offsets = [8, 8], sizes = [8, 8], strides = [1, 1]} : vector<16x16xf32> to vector<8x8xf32>
    %175 = vector.extract_strided_slice %174 {offsets = [0, 0], sizes = [1, 8], strides = [1, 1]} : vector<8x8xf32> to vector<1x8xf32>
    %176 = vector.extract_strided_slice %174 {offsets = [1, 0], sizes = [1, 8], strides = [1, 1]} : vector<8x8xf32> to vector<1x8xf32>
    %177 = vector.extract_strided_slice %174 {offsets = [2, 0], sizes = [1, 8], strides = [1, 1]} : vector<8x8xf32> to vector<1x8xf32>
    %178 = vector.extract_strided_slice %174 {offsets = [3, 0], sizes = [1, 8], strides = [1, 1]} : vector<8x8xf32> to vector<1x8xf32>
    %179 = vector.extract_strided_slice %174 {offsets = [4, 0], sizes = [1, 8], strides = [1, 1]} : vector<8x8xf32> to vector<1x8xf32>
    %180 = vector.extract_strided_slice %174 {offsets = [5, 0], sizes = [1, 8], strides = [1, 1]} : vector<8x8xf32> to vector<1x8xf32>
    %181 = vector.extract_strided_slice %174 {offsets = [6, 0], sizes = [1, 8], strides = [1, 1]} : vector<8x8xf32> to vector<1x8xf32>
    %182 = vector.extract_strided_slice %174 {offsets = [7, 0], sizes = [1, 8], strides = [1, 1]} : vector<8x8xf32> to vector<1x8xf32>
    %183 = tpu.concatenate %175, %176, %177, %178, %179, %180, %181, %182 in 1 : vector<1x8xf32>, vector<1x8xf32>, vector<1x8xf32>, vector<1x8xf32>, vector<1x8xf32>, vector<1x8xf32>, vector<1x8xf32>, vector<1x8xf32> -> vector<1x64xf32>
    %184 = tpu.concatenate %173, %183 in 1 : vector<1x64xf32>, vector<1x64xf32> -> vector<1x128xf32>
    %c0_49 = arith.constant 0 : index
    %c0_50 = arith.constant 0 : index
    %185 = vector.load %arg16[%c0_49, %c0_50] : memref<1x128xf32, #tpu.memory_space<vmem>>, vector<1x128xf32>
    tpu.vector_store %arg16[%c0_49, %c0_50], %184 {strides = array<i32>} : memref<1x128xf32, #tpu.memory_space<vmem>>, vector<1x128xf32>,
    return
  }
  func.func @transform_0(%arg0: i32) -> (i32, i32) {
    %c0_i32 = arith.constant 0 : i32
    %c0_i32_0 = arith.constant 0 : i32
    %c0_i32_1 = arith.constant 0 : i32
    return %c0_i32, %c0_i32_0 : i32, i32
  }
  func.func @transform_1(%arg0: i32) -> (i32, i32) {
    %c0_i32 = arith.constant 0 : i32
    %c0_i32_0 = arith.constant 0 : i32
    %c0_i32_1 = arith.constant 0 : i32
    return %c0_i32, %c0_i32_0 : i32, i32
  }
  func.func @transform_2(%arg0: i32) -> (i32, i32) {
    %c0_i32 = arith.constant 0 : i32
    %c0_i32_0 = arith.constant 0 : i32
    %c0_i32_1 = arith.constant 0 : i32
    return %c0_i32, %c0_i32_0 : i32, i32
  }
  func.func @transform_3(%arg0: i32) -> (i32, i32) {
    %c0_i32 = arith.constant 0 : i32
    %c0_i32_0 = arith.constant 0 : i32
    %c0_i32_1 = arith.constant 0 : i32
    return %c0_i32, %c0_i32_0 : i32, i32
  }
  func.func @transform_4(%arg0: i32) -> (i32, i32) {
    %c0_i32 = arith.constant 0 : i32
    %c0_i32_0 = arith.constant 0 : i32
    %c0_i32_1 = arith.constant 0 : i32
    return %c0_i32, %c0_i32_0 : i32, i32
  }
  func.func @transform_5(%arg0: i32) -> (i32, i32) {
    %c0_i32 = arith.constant 0 : i32
    %c0_i32_0 = arith.constant 0 : i32
    %c0_i32_1 = arith.constant 0 : i32
    return %c0_i32, %c0_i32_0 : i32, i32
  }
  func.func @transform_6(%arg0: i32) -> (i32, i32) {
    %c0_i32 = arith.constant 0 : i32
    %c0_i32_0 = arith.constant 0 : i32
    %c0_i32_1 = arith.constant 0 : i32
    return %c0_i32, %c0_i32_0 : i32, i32
  }
  func.func @transform_7(%arg0: i32) -> (i32, i32) {
    %c0_i32 = arith.constant 0 : i32
    %c0_i32_0 = arith.constant 0 : i32
    %c0_i32_1 = arith.constant 0 : i32
    return %c0_i32, %c0_i32_0 : i32, i32
  }
  func.func @transform_8(%arg0: i32) -> (i32, i32) {
    %c0_i32 = arith.constant 0 : i32
    %c0_i32_0 = arith.constant 0 : i32
    %c0_i32_1 = arith.constant 0 : i32
    return %c0_i32, %c0_i32_0 : i32, i32
  }
  func.func @transform_9(%arg0: i32) -> (i32, i32) {
    %c0_i32 = arith.constant 0 : i32
    %c0_i32_0 = arith.constant 0 : i32
    %c0_i32_1 = arith.constant 0 : i32
    return %c0_i32, %c0_i32_0 : i32, i32
  }
  func.func @transform_10(%arg0: i32) -> (i32, i32) {
    %c0_i32 = arith.constant 0 : i32
    %c0_i32_0 = arith.constant 0 : i32
    %c0_i32_1 = arith.constant 0 : i32
    return %c0_i32, %c0_i32_0 : i32, i32
  }
  func.func @transform_11(%arg0: i32) -> (i32, i32) {
    %c0_i32 = arith.constant 0 : i32
    %c0_i32_0 = arith.constant 0 : i32
    %c0_i32_1 = arith.constant 0 : i32
    return %c0_i32, %c0_i32_0 : i32, i32
  }
  func.func @transform_12(%arg0: i32) -> (i32, i32) {
    %c0_i32 = arith.constant 0 : i32
    %c0_i32_0 = arith.constant 0 : i32
    %c0_i32_1 = arith.constant 0 : i32
    return %c0_i32, %c0_i32_0 : i32, i32
  }
  func.func @transform_13(%arg0: i32) -> (i32, i32) {
    %c0_i32 = arith.constant 0 : i32
    %c0_i32_0 = arith.constant 0 : i32
    %c0_i32_1 = arith.constant 0 : i32
    return %c0_i32, %c0_i32_0 : i32, i32
  }
  func.func @transform_14(%arg0: i32) -> (i32, i32) {
    %c0_i32 = arith.constant 0 : i32
    %c0_i32_0 = arith.constant 0 : i32
    %c0_i32_1 = arith.constant 0 : i32
    return %c0_i32, %c0_i32_0 : i32, i32
  }
  func.func @transform_15(%arg0: i32) -> (i32, i32) {
    %c0_i32 = arith.constant 0 : i32
    %c0_i32_0 = arith.constant 0 : i32
    %c0_i32_1 = arith.constant 0 : i32
    return %c0_i32, %c0_i32_0 : i32, i32
  }
}

</mosaic_0001>

<llo_original>
// kernel: tpu_custom_call.1
$region0: #{tpu_custom_call.1}
  #allocation0 [shape = 'u32[]', space=smem, size = 0x4, offset = 0x4, fixed_abs, tag = 'smem constant byte address 0x4 - core index']
  #allocation1 [shape = 'u32[144,128]{1,0:T(1,128)}', space=vmem, size = 0x12000, scoped, tag = 'internal scratch']
  %s0 = inlined_call_operand.vmem [shape: f32[16,32], index: 0, kind: input, shape index: {}]
  %s1 = inlined_call_operand.vmem [shape: f32[16,16], index: 1, kind: input, shape index: {}]
  %s2 = inlined_call_operand.vmem [shape: bf16[32,96], index: 2, kind: input, shape index: {}]
  %s3 = inlined_call_operand.vmem [shape: f32[1,96], index: 3, kind: input, shape index: {}]
  %s4 = inlined_call_operand.hbm [shape: bf16[32,32], index: 4, kind: input, shape index: {}]
  %s5 = inlined_call_operand.vmem [shape: f32[1,32], index: 5, kind: input, shape index: {}]
  %s6 = inlined_call_operand.vmem [shape: f32[1,32], index: 6, kind: input, shape index: {}]
  %s7 = inlined_call_operand.vmem [shape: f32[1,32], index: 7, kind: input, shape index: {}]
  %s8 = inlined_call_operand.hbm [shape: bf16[32,64], index: 8, kind: input, shape index: {}]
  %s9 = inlined_call_operand.vmem [shape: f32[1,64], index: 9, kind: input, shape index: {}]
  %s10 = inlined_call_operand.vmem [shape: bf16[64,32], index: 10, kind: input, shape index: {}]
  %s11 = inlined_call_operand.vmem [shape: f32[1,32], index: 11, kind: input, shape index: {}]
  %s12 = inlined_call_operand.vmem [shape: f32[1,32], index: 12, kind: input, shape index: {}]
  %s13 = inlined_call_operand.vmem [shape: f32[1,32], index: 13, kind: input, shape index: {}]
  %s14 = inlined_call_operand.hbm [shape: f32[4,128], index: 14, kind: output, shape index: {0}]
  %s15 = inlined_call_operand.hbm [shape: f32[1,128], index: 15, kind: output, shape index: {1}]
  %16 = xla_tuple %s14, %s15
  %s17 = sld [smem:[#allocation0]]
  $region82: #{tpu_custom_call.1} parent=0
    _
  %s19 = ssub.s32 1, %s17
  %s20 = scalar_select 0, %s19, %s17
  $region1: #{tpu_custom_call.1} parent=0
    #allocation2 [shape = 'u8[8192]{0}', space=vmem, size = 0x2000, scoped, tag = 'input window, operand 4, single buffered']
    #allocation3 [shape = 's32[1]{0}', space=sflag, size = 0x4, scoped, tag = 'scoped memory for tpu_custom_call.1']
    #allocation4 [shape = 's32[1]{0}', space=sflag, size = 0x4, scoped, tag = 'scoped memory for tpu_custom_call.1']
    #allocation5 [shape = 'u8[8192]{0}', space=vmem, size = 0x2000, scoped, tag = 'input window, operand 8, single buffered']
    #allocation6 [shape = 's32[1]{0}', space=sflag, size = 0x4, scoped, tag = 'scoped memory for tpu_custom_call.1']
    #allocation7 [shape = 'u8[2048]{0}', space=vmem, size = 0x800, scoped, tag = 'output window, operand 0, single buffered']
    #allocation8 [shape = 'u8[512]{0}', space=vmem, size = 0x400, scoped, tag = 'output window, operand 1, single buffered']
    #allocation9 [shape = 's32[1]{0}', space=sflag, size = 0x4, scoped, tag = 'scoped memory for tpu_custom_call.1']
    %21 = vsyncpa [#allocation3], 0
    %22 = vsyncpa [#allocation6], 0
    %23 = vsyncpa [#allocation4], 0
    %24 = vsyncpa [#allocation9], 0
    // Predicated region
    $region2: #{tpu_custom_call.1} parent=1 // pred_check
      _
    $region3: #{tpu_custom_call.1} parent=1 // pred_check_branch
      %26 = sbr.rel (0) target = $region5
    $region4: #{tpu_custom_call.1} parent=1 // pred_region
      _
    $region5: #{tpu_custom_call.1} parent=1 // pred_fallthru
      _
    // Predicated region
    $region6: #{tpu_custom_call.1} parent=1 // pred_check
      _
    $region7: #{tpu_custom_call.1} parent=1 // pred_check_branch
      %28 = sbr.rel (0) target = $region9
    $region8: #{tpu_custom_call.1} parent=1 // pred_region
      _
    $region9: #{tpu_custom_call.1} parent=1 // pred_fallthru
      _
    // Predicated region
    $region10: #{tpu_custom_call.1} parent=1 // pred_check
      _
    $region11: #{tpu_custom_call.1} parent=1 // pred_check_branch
      %30 = sbr.rel (0) target = $region13
    $region12: #{tpu_custom_call.1} parent=1 // pred_region
      _
    $region13: #{tpu_custom_call.1} parent=1 // pred_fallthru
      _
    // Predicated region
    $region14: #{tpu_custom_call.1} parent=1 // pred_check
      _
    $region15: #{tpu_custom_call.1} parent=1 // pred_check_branch
      %32 = sbr.rel (0) target = $region17
    $region16: #{tpu_custom_call.1} parent=1 // pred_region
      _
    $region17: #{tpu_custom_call.1} parent=1 // pred_fallthru
      _
    // Predicated region
    $region18: #{tpu_custom_call.1} parent=1 // pred_check
      _
    $region19: #{tpu_custom_call.1} parent=1 // pred_check_branch
      %34 = sbr.rel (0) target = $region21
    $region20: #{tpu_custom_call.1} parent=1 // pred_region
      %s36 = ssub.s32 256, 256
      %37 = vsyncadd [#allocation3], %s36
      %s38 = sshll.u32 [#allocation2], 4
      %s39 = int_to_ptr.vmem [resolvable:$true] %s38
      %44 = dma.hbm_to_vmem [thread:$0]  %s4, 256, %s39, [#allocation3], 64, 64, 4
    $region21: #{tpu_custom_call.1} parent=1 // pred_fallthru
      _
    // Predicated region
    $region22: #{tpu_custom_call.1} parent=1 // pred_check
      _
    $region23: #{tpu_custom_call.1} parent=1 // pred_check_branch
      %46 = sbr.rel (0) target = $region25
    $region24: #{tpu_custom_call.1} parent=1 // pred_region
      _
    $region25: #{tpu_custom_call.1} parent=1 // pred_fallthru
      _
    // Predicated region
    $region26: #{tpu_custom_call.1} parent=1 // pred_check
      _
    $region27: #{tpu_custom_call.1} parent=1 // pred_check_branch
      %48 = sbr.rel (0) target = $region29
    $region28: #{tpu_custom_call.1} parent=1 // pred_region
      _
    $region29: #{tpu_custom_call.1} parent=1 // pred_fallthru
      _
    // Predicated region
    $region30: #{tpu_custom_call.1} parent=1 // pred_check
      _
    $region31: #{tpu_custom_call.1} parent=1 // pred_check_branch
      %50 = sbr.rel (0) target = $region33
    $region32: #{tpu_custom_call.1} parent=1 // pred_region
      _
    $region33: #{tpu_custom_call.1} parent=1 // pred_fallthru
      _
    // Predicated region
    $region34: #{tpu_custom_call.1} parent=1 // pred_check
      _
    $region35: #{tpu_custom_call.1} parent=1 // pred_check_branch
      %52 = sbr.rel (0) target = $region37
    $region36: #{tpu_custom_call.1} parent=1 // pred_region
      %s54 = ssub.s32 256, 256
      %55 = vsyncadd [#allocation6], %s54
      %s56 = sshll.u32 [#allocation5], 4
      %s57 = int_to_ptr.vmem [resolvable:$true] %s56
      %62 = dma.hbm_to_vmem [thread:$0]  %s8, 256, %s57, [#allocation6], 64, 64, 4
    $region37: #{tpu_custom_call.1} parent=1 // pred_fallthru
      _
    // Predicated region
    $region38: #{tpu_custom_call.1} parent=1 // pred_check
      _
    $region39: #{tpu_custom_call.1} parent=1 // pred_check_branch
      %64 = sbr.rel (0) target = $region41
    $region40: #{tpu_custom_call.1} parent=1 // pred_region
      _
    $region41: #{tpu_custom_call.1} parent=1 // pred_fallthru
      _
    // Predicated region
    $region42: #{tpu_custom_call.1} parent=1 // pred_check
      _
    $region43: #{tpu_custom_call.1} parent=1 // pred_check_branch
      %66 = sbr.rel (0) target = $region45
    $region44: #{tpu_custom_call.1} parent=1 // pred_region
      _
    $region45: #{tpu_custom_call.1} parent=1 // pred_fallthru
      _
    // Predicated region
    $region46: #{tpu_custom_call.1} parent=1 // pred_check
      _
    $region47: #{tpu_custom_call.1} parent=1 // pred_check_branch
      %68 = sbr.rel (0) target = $region49
    $region48: #{tpu_custom_call.1} parent=1 // pred_region
      _
    $region49: #{tpu_custom_call.1} parent=1 // pred_fallthru
      _
    // Predicated region
    $region50: #{tpu_custom_call.1} parent=1 // pred_check
      _
    $region51: #{tpu_custom_call.1} parent=1 // pred_check_branch
      %70 = sbr.rel (0) target = $region53
    $region52: #{tpu_custom_call.1} parent=1 // pred_region
      _
    $region53: #{tpu_custom_call.1} parent=1 // pred_fallthru
      _
    // Predicated region
    $region54: #{tpu_custom_call.1} parent=1 // pred_check
      _
    $region55: #{tpu_custom_call.1} parent=1 // pred_check_branch
      %72 = sbr.rel (0) target = $region57
    $region56: #{tpu_custom_call.1} parent=1 // pred_region
      _
    $region57: #{tpu_custom_call.1} parent=1 // pred_fallthru
      _
    // Predicated region
    $region58: #{tpu_custom_call.1} parent=1 // pred_check
      _
    $region59: #{tpu_custom_call.1} parent=1 // pred_check_branch
      %74 = sbr.rel (0) target = $region61
    $region60: #{tpu_custom_call.1} parent=1 // pred_region
      %75 = dma.done [#allocation3], 256
    $region61: #{tpu_custom_call.1} parent=1 // pred_fallthru
      _
    // Predicated region
    $region62: #{tpu_custom_call.1} parent=1 // pred_check
      _
    $region63: #{tpu_custom_call.1} parent=1 // pred_check_branch
      %77 = sbr.rel (0) target = $region65
    $region64: #{tpu_custom_call.1} parent=1 // pred_region
      %78 = dma.done [#allocation6], 256
    $region65: #{tpu_custom_call.1} parent=1 // pred_fallthru
      _
    %v80 = vld [vmem:[%s0] sm:$0xff]
    %v81 = vld [vmem:[%s0 + $0x8] sm:$0xff]
    %v82 = vpack.c.bf16 %v81, %v80
    %v83 = vld [vmem:[%s2] sm:$0xf]
    %v84 = vld [vmem:[%s2 + $0x4] sm:$0xf]
    %v85 = vld [vmem:[%s2 + $0x8] sm:$0xf]
    %v86 = vld [vmem:[%s2 + $0xc] sm:$0xf]
    %v87 = vld [vmem:[%s3] sm:$0x1]
    %v89 = vlaneseq
    %v90 = vshrl.u32 %v89, 7
    %v91 = vsub.s32 0, %v90
    %v92 = vrot.slane %v87, %v91
    %v98 = vunpack.c.l.b16 %v83
    %v99 = vunpack.c.l.b16 %v84
    %v100 = vunpack.c.l.b16 %v85
    %v101 = vunpack.c.l.b16 %v86
    %v102 = vpack.c.b16 %v99, %v98
    %v103 = vpack.c.b16 %v101, %v100
    %vm106 = vcmask 261120
    %v108 = vsel %vm106, %v82, 0
    %110 = vmatprep.subr.bf16.mxu0 0
    %111 = vmatpush1.bf16.msra.mxu0 %v102
    %112 = vmatprep.subr.bf16.mxu0 0
    %113 = vmatpush1.bf16.msra.mxu0 %v103
    %114 = vmatprep.subr.bf16.mxu0 0
    %115 = vmatpush1.bf16.msra.mxu0 0
    %116 = vmatprep.subr.bf16.mxu0 0
    %117 = vmatpush1.bf16.msra.mxu0 0
    %118 = vmatprep.subr.bf16.mxu0 0
    %119 = vmatpush1.bf16.msra.mxu0 0
    %120 = vmatprep.subr.bf16.mxu0 0
    %121 = vmatpush1.bf16.msra.mxu0 0
    %122 = vmatprep.subr.bf16.mxu0 0
    %123 = vmatpush1.bf16.msra.mxu0 0
    %124 = vmatprep.subr.bf16.mxu0 0
    %125 = vmatpush1.bf16.msra.mxu0 0
    %126 = vmatprep.subr.bf16.mxu0 0
    %127 = vmatpush1.bf16.msra.mxu0 0
    %128 = vmatprep.subr.bf16.mxu0 0
    %129 = vmatpush1.bf16.msra.mxu0 0
    %130 = vmatprep.subr.bf16.mxu0 0
    %131 = vmatpush1.bf16.msra.mxu0 0
    %132 = vmatprep.subr.bf16.mxu0 0
    %133 = vmatpush1.bf16.msra.mxu0 0
    %134 = vmatprep.subr.bf16.mxu0 0
    %135 = vmatpush1.bf16.msra.mxu0 0
    %136 = vmatprep.subr.bf16.mxu0 0
    %137 = vmatpush1.bf16.msra.mxu0 0
    %138 = vmatprep.subr.bf16.mxu0 0
    %139 = vmatpush1.bf16.msra.mxu0 0
    %140 = vmatprep.subr.bf16.mxu0 0
    %141 = vmatpush1.bf16.msra.mxu0 0
    %142 = vmatprep.mubr.bf16.mxu0 0
    %143 = vmatmul.mubr.bf16.gmra.mrb[0].mxu0 %v108
    %v144 = vpop.f32.mrb[0].mxu0
    %v145 = vadd.f32 %v92, %v144
    %v146 = vpop.f32.mrb[0].mxu0
    %v147 = vpop.f32.mrb[0].mxu0
    %v148 = vadd.f32 %v92, %v147
    %v149 = vpop.f32.mrb[0].mxu0
    %150 = vdwg.mxu0
    %153 = vrot.lane.b32.xlu0 %v145, 120
    %v154 = vpop.permute.xlu0 %153
    %155 = vrot.lane.b32.xlu0 %v148, 120
    %v156 = vpop.permute.xlu0 %155
    %159 = vrot.lane.b32.xlu0 %v145, 112
    %v160 = vpop.permute.xlu0 %159
    %161 = vrot.lane.b32.xlu0 %v148, 112
    %v162 = vpop.permute.xlu0 %161
    %165 = vrot.lane.b32.xlu0 %v145, 104
    %v166 = vpop.permute.xlu0 %165
    %167 = vrot.lane.b32.xlu0 %v148, 104
    %v168 = vpop.permute.xlu0 %167
    %v171 = vpack.c.bf16 %v148, %v145
    %v172 = vpack.c.bf16 %v156, %v154
    %v173 = vpack.c.bf16 %v162, %v160
    %v174 = vpack.c.bf16 %v168, %v166
    %v175 = vld [vmem:[%s1] sm:$0xff]
    %v176 = vld [vmem:[%s1 + $0x8] sm:$0xff]
    %178 = vrot.lane.b32.xlu0 %v171, 96
    %v179 = vpop.permute.xlu0 %178
    %vm180 = vcmask 64512
    %v182 = vsel %vm180, %v171, 0
    %v185 = vsel %vm180, %v179, 0
    %187 = vmatprep.subr.bf16.mxu0 0
    %188 = vmatpush1.bf16.xpose.msra.mxu0 %v185
    %189 = vmatprep.subr.bf16.mxu0 0
    %190 = vmatpush1.bf16.xpose.msra.mxu0 0
    %191 = vmatprep.subr.bf16.mxu0 0
    %192 = vmatpush1.bf16.xpose.msra.mxu0 0
    %193 = vmatprep.subr.bf16.mxu0 0
    %194 = vmatpush1.bf16.xpose.msra.mxu0 0
    %195 = vmatprep.subr.bf16.mxu0 0
    %196 = vmatpush1.bf16.xpose.msra.mxu0 0
    %197 = vmatprep.subr.bf16.mxu0 0
    %198 = vmatpush1.bf16.xpose.msra.mxu0 0
    %199 = vmatprep.subr.bf16.mxu0 0
    %200 = vmatpush1.bf16.xpose.msra.mxu0 0
    %201 = vmatprep.subr.bf16.mxu0 0
    %202 = vmatpush1.bf16.xpose.msra.mxu0 0
    %203 = vmatprep.subr.bf16.mxu0 0
    %204 = vmatpush1.bf16.xpose.msra.mxu0 0
    %205 = vmatprep.subr.bf16.mxu0 0
    %206 = vmatpush1.bf16.xpose.msra.mxu0 0
    %207 = vmatprep.subr.bf16.mxu0 0
    %208 = vmatpush1.bf16.xpose.msra.mxu0 0
    %209 = vmatprep.subr.bf16.mxu0 0
    %210 = vmatpush1.bf16.xpose.msra.mxu0 0
    %211 = vmatprep.subr.bf16.mxu0 0
    %212 = vmatpush1.bf16.xpose.msra.mxu0 0
    %213 = vmatprep.subr.bf16.mxu0 0
    %214 = vmatpush1.bf16.xpose.msra.mxu0 0
    %215 = vmatprep.subr.bf16.mxu0 0
    %216 = vmatpush1.bf16.xpose.msra.mxu0 0
    %217 = vmatprep.subr.bf16.mxu0 0
    %218 = vmatpush1.bf16.xpose.msra.mxu0 0
    %219 = vmatprep.mubr.bf16.mxu0 0
    %220 = vmatmul.mubr.bf16.gmra.mrb[0].mxu0 %v182
    %v221 = vpop.f32.mrb[0].mxu0
    %v222 = vadd.f32 %v175, %v221
    %v223 = vpop.f32.mrb[0].mxu0
    %v224 = vpop.f32.mrb[0].mxu0
    %v225 = vadd.f32 %v176, %v224
    %v226 = vpop.f32.mrb[0].mxu0
    %227 = vdwg.mxu0
    %229 = vrot.lane.b32.xlu0 %v172, 96
    %v230 = vpop.permute.xlu0 %229
    %v232 = vsel %vm180, %v172, 0
    %v235 = vsel %vm180, %v230, 0
    %237 = vmatprep.subr.bf16.mxu0 0
    %238 = vmatpush1.bf16.xpose.msra.mxu0 %v235
    %239 = vmatprep.subr.bf16.mxu0 0
    %240 = vmatpush1.bf16.xpose.msra.mxu0 0
    %241 = vmatprep.subr.bf16.mxu0 0
    %242 = vmatpush1.bf16.xpose.msra.mxu0 0
    %243 = vmatprep.subr.bf16.mxu0 0
    %244 = vmatpush1.bf16.xpose.msra.mxu0 0
    %245 = vmatprep.subr.bf16.mxu0 0
    %246 = vmatpush1.bf16.xpose.msra.mxu0 0
    %247 = vmatprep.subr.bf16.mxu0 0
    %248 = vmatpush1.bf16.xpose.msra.mxu0 0
    %249 = vmatprep.subr.bf16.mxu0 0
    %250 = vmatpush1.bf16.xpose.msra.mxu0 0
    %251 = vmatprep.subr.bf16.mxu0 0
    %252 = vmatpush1.bf16.xpose.msra.mxu0 0
    %253 = vmatprep.subr.bf16.mxu0 0
    %254 = vmatpush1.bf16.xpose.msra.mxu0 0
    %255 = vmatprep.subr.bf16.mxu0 0
    %256 = vmatpush1.bf16.xpose.msra.mxu0 0
    %257 = vmatprep.subr.bf16.mxu0 0
    %258 = vmatpush1.bf16.xpose.msra.mxu0 0
    %259 = vmatprep.subr.bf16.mxu0 0
    %260 = vmatpush1.bf16.xpose.msra.mxu0 0
    %261 = vmatprep.subr.bf16.mxu0 0
    %262 = vmatpush1.bf16.xpose.msra.mxu0 0
    %263 = vmatprep.subr.bf16.mxu0 0
    %264 = vmatpush1.bf16.xpose.msra.mxu0 0
    %265 = vmatprep.subr.bf16.mxu0 0
    %266 = vmatpush1.bf16.xpose.msra.mxu0 0
    %267 = vmatprep.subr.bf16.mxu0 0
    %268 = vmatpush1.bf16.xpose.msra.mxu0 0
    %269 = vmatprep.mubr.bf16.mxu0 0
    %270 = vmatmul.mubr.bf16.gmra.mrb[0].mxu0 %v232
    %v271 = vpop.f32.mrb[0].mxu0
    %v272 = vadd.f32 %v175, %v271
    %v273 = vpop.f32.mrb[0].mxu0
    %v274 = vpop.f32.mrb[0].mxu0
    %v275 = vadd.f32 %v176, %v274
    %v276 = vpop.f32.mrb[0].mxu0
    %277 = vdwg.mxu0
    %279 = vrot.lane.b32.xlu0 %v173, 96
    %v280 = vpop.permute.xlu0 %279
    %v282 = vsel %vm180, %v173, 0
    %v285 = vsel %vm180, %v280, 0
    %287 = vmatprep.subr.bf16.mxu0 0
    %288 = vmatpush1.bf16.xpose.msra.mxu0 %v285
    %289 = vmatprep.subr.bf16.mxu0 0
    %290 = vmatpush1.bf16.xpose.msra.mxu0 0
    %291 = vmatprep.subr.bf16.mxu0 0
    %292 = vmatpush1.bf16.xpose.msra.mxu0 0
    %293 = vmatprep.subr.bf16.mxu0 0
    %294 = vmatpush1.bf16.xpose.msra.mxu0 0
    %295 = vmatprep.subr.bf16.mxu0 0
    %296 = vmatpush1.bf16.xpose.msra.mxu0 0
    %297 = vmatprep.subr.bf16.mxu0 0
    %298 = vmatpush1.bf16.xpose.msra.mxu0 0
    %299 = vmatprep.subr.bf16.mxu0 0
    %300 = vmatpush1.bf16.xpose.msra.mxu0 0
    %301 = vmatprep.subr.bf16.mxu0 0
    %302 = vmatpush1.bf16.xpose.msra.mxu0 0
    %303 = vmatprep.subr.bf16.mxu0 0
    %304 = vmatpush1.bf16.xpose.msra.mxu0 0
    %305 = vmatprep.subr.bf16.mxu0 0
    %306 = vmatpush1.bf16.xpose.msra.mxu0 0
    %307 = vmatprep.subr.bf16.mxu0 0
    %308 = vmatpush1.bf16.xpose.msra.mxu0 0
    %309 = vmatprep.subr.bf16.mxu0 0
    %310 = vmatpush1.bf16.xpose.msra.mxu0 0
    %311 = vmatprep.subr.bf16.mxu0 0
    %312 = vmatpush1.bf16.xpose.msra.mxu0 0
    %313 = vmatprep.subr.bf16.mxu0 0
    %314 = vmatpush1.bf16.xpose.msra.mxu0 0
    %315 = vmatprep.subr.bf16.mxu0 0
    %316 = vmatpush1.bf16.xpose.msra.mxu0 0
    %317 = vmatprep.subr.bf16.mxu0 0
    %318 = vmatpush1.bf16.xpose.msra.mxu0 0
    %319 = vmatprep.mubr.bf16.mxu0 0
    %320 = vmatmul.mubr.bf16.gmra.mrb[0].mxu0 %v282
    %v321 = vpop.f32.mrb[0].mxu0
    %v322 = vadd.f32 %v175, %v321
    %v323 = vpop.f32.mrb[0].mxu0
    %v324 = vpop.f32.mrb[0].mxu0
    %v325 = vadd.f32 %v176, %v324
    %v326 = vpop.f32.mrb[0].mxu0
    %327 = vdwg.mxu0
    %329 = vrot.lane.b32.xlu0 %v174, 96
    %v330 = vpop.permute.xlu0 %329
    %v332 = vsel %vm180, %v174, 0
    %v335 = vsel %vm180, %v330, 0
    %337 = vmatprep.subr.bf16.mxu0 0
    %338 = vmatpush1.bf16.xpose.msra.mxu0 %v335
    %339 = vmatprep.subr.bf16.mxu0 0
    %340 = vmatpush1.bf16.xpose.msra.mxu0 0
    %341 = vmatprep.subr.bf16.mxu0 0
    %342 = vmatpush1.bf16.xpose.msra.mxu0 0
    %343 = vmatprep.subr.bf16.mxu0 0
    %344 = vmatpush1.bf16.xpose.msra.mxu0 0
    %345 = vmatprep.subr.bf16.mxu0 0
    %346 = vmatpush1.bf16.xpose.msra.mxu0 0
    %347 = vmatprep.subr.bf16.mxu0 0
    %348 = vmatpush1.bf16.xpose.msra.mxu0 0
    %349 = vmatprep.subr.bf16.mxu0 0
    %350 = vmatpush1.bf16.xpose.msra.mxu0 0
    %351 = vmatprep.subr.bf16.mxu0 0
    %352 = vmatpush1.bf16.xpose.msra.mxu0 0
    %353 = vmatprep.subr.bf16.mxu0 0
    %354 = vmatpush1.bf16.xpose.msra.mxu0 0
    %355 = vmatprep.subr.bf16.mxu0 0
    %356 = vmatpush1.bf16.xpose.msra.mxu0 0
    %357 = vmatprep.subr.bf16.mxu0 0
    %358 = vmatpush1.bf16.xpose.msra.mxu0 0
    %359 = vmatprep.subr.bf16.mxu0 0
    %360 = vmatpush1.bf16.xpose.msra.mxu0 0
    %361 = vmatprep.subr.bf16.mxu0 0
    %362 = vmatpush1.bf16.xpose.msra.mxu0 0
    %363 = vmatprep.subr.bf16.mxu0 0
    %364 = vmatpush1.bf16.xpose.msra.mxu0 0
    %365 = vmatprep.subr.bf16.mxu0 0
    %366 = vmatpush1.bf16.xpose.msra.mxu0 0
    %367 = vmatprep.subr.bf16.mxu0 0
    %368 = vmatpush1.bf16.xpose.msra.mxu0 0
    %369 = vmatprep.mubr.bf16.mxu0 0
    %370 = vmatmul.mubr.bf16.gmra.mrb[0].mxu0 %v332
    %v371 = vpop.f32.mrb[0].mxu0
    %v372 = vadd.f32 %v175, %v371
    %v373 = vpop.f32.mrb[0].mxu0
    %v374 = vpop.f32.mrb[0].mxu0
    %v375 = vadd.f32 %v176, %v374
    %v376 = vpop.f32.mrb[0].mxu0
    %377 = vdwg.mxu0
    %vm378 = vcmask 130048
    %v379 = vsel %vm378, %v222, -inf
    %380 = vmax.xlane.f32.xlu0 %v379
    %v381 = vpop.xlane.xlu0 %380
    %v382 = vsel %vm378, %v225, -inf
    %383 = vmax.xlane.f32.xlu0 %v382
    %v384 = vpop.xlane.xlu0 %383
    %v385 = vsel %vm378, %v272, -inf
    %386 = vmax.xlane.f32.xlu0 %v385
    %v387 = vpop.xlane.xlu0 %386
    %v388 = vsel %vm378, %v275, -inf
    %389 = vmax.xlane.f32.xlu0 %v388
    %v390 = vpop.xlane.xlu0 %389
    %v391 = vsel %vm378, %v322, -inf
    %392 = vmax.xlane.f32.xlu0 %v391
    %v393 = vpop.xlane.xlu0 %392
    %v394 = vsel %vm378, %v325, -inf
    %395 = vmax.xlane.f32.xlu0 %v394
    %v396 = vpop.xlane.xlu0 %395
    %v397 = vsel %vm378, %v372, -inf
    %398 = vmax.xlane.f32.xlu0 %v397
    %v399 = vpop.xlane.xlu0 %398
    %v400 = vsel %vm378, %v375, -inf
    %401 = vmax.xlane.f32.xlu0 %v400
    %v402 = vpop.xlane.xlu0 %401
    %v403 = vsub.f32 %v222, %v381
    %v404 = vsub.f32 %v225, %v384
    %v405 = vsub.f32 %v272, %v387
    %v406 = vsub.f32 %v275, %v390
    %v407 = vsub.f32 %v322, %v393
    %v408 = vsub.f32 %v325, %v396
    %v409 = vsub.f32 %v372, %v399
    %v410 = vsub.f32 %v375, %v402
    %v411 = vmul.f32 %v403, 1.442695
    %v412 = vpow.pop %v411
    %v413 = vmul.f32 %v404, 1.442695
    %v414 = vpow.pop %v413
    %v415 = vmul.f32 %v405, 1.442695
    %v416 = vpow.pop %v415
    %v417 = vmul.f32 %v406, 1.442695
    %v418 = vpow.pop %v417
    %v419 = vmul.f32 %v407, 1.442695
    %v420 = vpow.pop %v419
    %v421 = vmul.f32 %v408, 1.442695
    %v422 = vpow.pop %v421
    %v423 = vmul.f32 %v409, 1.442695
    %v424 = vpow.pop %v423
    %v425 = vmul.f32 %v410, 1.442695
    %v426 = vpow.pop %v425
    %v427 = vsel %vm378, %v412, 0.0
    %428 = vadd.xlane.f32.xlu0 %v427
    %v429 = vpop.xlane.xlu0 %428
    %v430 = vsel %vm378, %v414, 0.0
    %431 = vadd.xlane.f32.xlu0 %v430
    %v432 = vpop.xlane.xlu0 %431
    %v433 = vsel %vm378, %v416, 0.0
    %434 = vadd.xlane.f32.xlu0 %v433
    %v435 = vpop.xlane.xlu0 %434
    %v436 = vsel %vm378, %v418, 0.0
    %437 = vadd.xlane.f32.xlu0 %v436
    %v438 = vpop.xlane.xlu0 %437
    %v439 = vsel %vm378, %v420, 0.0
    %440 = vadd.xlane.f32.xlu0 %v439
    %v441 = vpop.xlane.xlu0 %440
    %v442 = vsel %vm378, %v422, 0.0
    %443 = vadd.xlane.f32.xlu0 %v442
    %v444 = vpop.xlane.xlu0 %443
    %v445 = vsel %vm378, %v424, 0.0
    %446 = vadd.xlane.f32.xlu0 %v445
    %v447 = vpop.xlane.xlu0 %446
    %v448 = vsel %vm378, %v426, 0.0
    %449 = vadd.xlane.f32.xlu0 %v448
    %v450 = vpop.xlane.xlu0 %449
    %v451 = vrcp.pop %v429
    %v452 = vmul.f32 %v412, %v451
    %v453 = vrcp.pop %v432
    %v454 = vmul.f32 %v414, %v453
    %v455 = vrcp.pop %v435
    %v456 = vmul.f32 %v416, %v455
    %v457 = vrcp.pop %v438
    %v458 = vmul.f32 %v418, %v457
    %v459 = vrcp.pop %v441
    %v460 = vmul.f32 %v420, %v459
    %v461 = vrcp.pop %v444
    %v462 = vmul.f32 %v422, %v461
    %v463 = vrcp.pop %v447
    %v464 = vmul.f32 %v424, %v463
    %v465 = vrcp.pop %v450
    %v466 = vmul.f32 %v426, %v465
    %v467 = vpack.c.bf16 %v454, %v452
    %v468 = vpack.c.bf16 %v458, %v456
    %v469 = vpack.c.bf16 %v462, %v460
    %v470 = vpack.c.bf16 %v466, %v464
    %471 = vrot.lane.b32.xlu0 %v171, 64
    %v472 = vpop.permute.xlu0 %471
    %v475 = vsel %vm378, %v467, 0
    %477 = vmatprep.subr.bf16.mxu0 0
    %478 = vmatpush1.bf16.msra.mxu0 %v472
    %479 = vmatprep.subr.bf16.mxu0 0
    %480 = vmatpush1.bf16.msra.mxu0 0
    %481 = vmatprep.subr.bf16.mxu0 0
    %482 = vmatpush1.bf16.msra.mxu0 0
    %483 = vmatprep.subr.bf16.mxu0 0
    %484 = vmatpush1.bf16.msra.mxu0 0
    %485 = vmatprep.subr.bf16.mxu0 0
    %486 = vmatpush1.bf16.msra.mxu0 0
    %487 = vmatprep.subr.bf16.mxu0 0
    %488 = vmatpush1.bf16.msra.mxu0 0
    %489 = vmatprep.subr.bf16.mxu0 0
    %490 = vmatpush1.bf16.msra.mxu0 0
    %491 = vmatprep.subr.bf16.mxu0 0
    %492 = vmatpush1.bf16.msra.mxu0 0
    %493 = vmatprep.subr.bf16.mxu0 0
    %494 = vmatpush1.bf16.msra.mxu0 0
    %495 = vmatprep.subr.bf16.mxu0 0
    %496 = vmatpush1.bf16.msra.mxu0 0
    %497 = vmatprep.subr.bf16.mxu0 0
    %498 = vmatpush1.bf16.msra.mxu0 0
    %499 = vmatprep.subr.bf16.mxu0 0
    %500 = vmatpush1.bf16.msra.mxu0 0
    %501 = vmatprep.subr.bf16.mxu0 0
    %502 = vmatpush1.bf16.msra.mxu0 0
    %503 = vmatprep.subr.bf16.mxu0 0
    %504 = vmatpush1.bf16.msra.mxu0 0
    %505 = vmatprep.subr.bf16.mxu0 0
    %506 = vmatpush1.bf16.msra.mxu0 0
    %507 = vmatprep.subr.bf16.mxu0 0
    %508 = vmatpush1.bf16.msra.mxu0 0
    %509 = vmatprep.mubr.bf16.mxu0 0
    %510 = vmatmul.mubr.bf16.gmra.mrb[0].mxu0 %v475
    %v511 = vpop.f32.mrb[0].mxu0
    %v512 = vadd.f32 0.0, %v511
    %v513 = vpop.f32.mrb[0].mxu0
    %v514 = vpop.f32.mrb[0].mxu0
    %v515 = vadd.f32 0.0, %v514
    %v516 = vpop.f32.mrb[0].mxu0
    %517 = vdwg.mxu0
    %518 = vrot.lane.b32.xlu0 %v172, 64
    %v519 = vpop.permute.xlu0 %518
    %v522 = vsel %vm378, %v468, 0
    %524 = vmatprep.subr.bf16.mxu0 0
    %525 = vmatpush1.bf16.msra.mxu0 %v519
    %526 = vmatprep.subr.bf16.mxu0 0
    %527 = vmatpush1.bf16.msra.mxu0 0
    %528 = vmatprep.subr.bf16.mxu0 0
    %529 = vmatpush1.bf16.msra.mxu0 0
    %530 = vmatprep.subr.bf16.mxu0 0
    %531 = vmatpush1.bf16.msra.mxu0 0
    %532 = vmatprep.subr.bf16.mxu0 0
    %533 = vmatpush1.bf16.msra.mxu0 0
    %534 = vmatprep.subr.bf16.mxu0 0
    %535 = vmatpush1.bf16.msra.mxu0 0
    %536 = vmatprep.subr.bf16.mxu0 0
    %537 = vmatpush1.bf16.msra.mxu0 0
    %538 = vmatprep.subr.bf16.mxu0 0
    %539 = vmatpush1.bf16.msra.mxu0 0
    %540 = vmatprep.subr.bf16.mxu0 0
    %541 = vmatpush1.bf16.msra.mxu0 0
    %542 = vmatprep.subr.bf16.mxu0 0
    %543 = vmatpush1.bf16.msra.mxu0 0
    %544 = vmatprep.subr.bf16.mxu0 0
    %545 = vmatpush1.bf16.msra.mxu0 0
    %546 = vmatprep.subr.bf16.mxu0 0
    %547 = vmatpush1.bf16.msra.mxu0 0
    %548 = vmatprep.subr.bf16.mxu0 0
    %549 = vmatpush1.bf16.msra.mxu0 0
    %550 = vmatprep.subr.bf16.mxu0 0
    %551 = vmatpush1.bf16.msra.mxu0 0
    %552 = vmatprep.subr.bf16.mxu0 0
    %553 = vmatpush1.bf16.msra.mxu0 0
    %554 = vmatprep.subr.bf16.mxu0 0
    %555 = vmatpush1.bf16.msra.mxu0 0
    %556 = vmatprep.mubr.bf16.mxu0 0
    %557 = vmatmul.mubr.bf16.gmra.mrb[0].mxu0 %v522
    %v558 = vpop.f32.mrb[0].mxu0
    %v559 = vadd.f32 0.0, %v558
    %v560 = vpop.f32.mrb[0].mxu0
    %v561 = vpop.f32.mrb[0].mxu0
    %v562 = vadd.f32 0.0, %v561
    %v563 = vpop.f32.mrb[0].mxu0
    %564 = vdwg.mxu0
    %565 = vrot.lane.b32.xlu0 %v173, 64
    %v566 = vpop.permute.xlu0 %565
    %v569 = vsel %vm378, %v469, 0
    %571 = vmatprep.subr.bf16.mxu0 0
    %572 = vmatpush1.bf16.msra.mxu0 %v566
    %573 = vmatprep.subr.bf16.mxu0 0
    %574 = vmatpush1.bf16.msra.mxu0 0
    %575 = vmatprep.subr.bf16.mxu0 0
    %576 = vmatpush1.bf16.msra.mxu0 0
    %577 = vmatprep.subr.bf16.mxu0 0
    %578 = vmatpush1.bf16.msra.mxu0 0
    %579 = vmatprep.subr.bf16.mxu0 0
    %580 = vmatpush1.bf16.msra.mxu0 0
    %581 = vmatprep.subr.bf16.mxu0 0
    %582 = vmatpush1.bf16.msra.mxu0 0
    %583 = vmatprep.subr.bf16.mxu0 0
    %584 = vmatpush1.bf16.msra.mxu0 0
    %585 = vmatprep.subr.bf16.mxu0 0
    %586 = vmatpush1.bf16.msra.mxu0 0
    %587 = vmatprep.subr.bf16.mxu0 0
    %588 = vmatpush1.bf16.msra.mxu0 0
    %589 = vmatprep.subr.bf16.mxu0 0
    %590 = vmatpush1.bf16.msra.mxu0 0
    %591 = vmatprep.subr.bf16.mxu0 0
    %592 = vmatpush1.bf16.msra.mxu0 0
    %593 = vmatprep.subr.bf16.mxu0 0
    %594 = vmatpush1.bf16.msra.mxu0 0
    %595 = vmatprep.subr.bf16.mxu0 0
    %596 = vmatpush1.bf16.msra.mxu0 0
    %597 = vmatprep.subr.bf16.mxu0 0
    %598 = vmatpush1.bf16.msra.mxu0 0
    %599 = vmatprep.subr.bf16.mxu0 0
    %600 = vmatpush1.bf16.msra.mxu0 0
    %601 = vmatprep.subr.bf16.mxu0 0
    %602 = vmatpush1.bf16.msra.mxu0 0
    %603 = vmatprep.mubr.bf16.mxu0 0
    %604 = vmatmul.mubr.bf16.gmra.mrb[0].mxu0 %v569
    %v605 = vpop.f32.mrb[0].mxu0
    %v606 = vadd.f32 0.0, %v605
    %v607 = vpop.f32.mrb[0].mxu0
    %v608 = vpop.f32.mrb[0].mxu0
    %v609 = vadd.f32 0.0, %v608
    %v610 = vpop.f32.mrb[0].mxu0
    %611 = vdwg.mxu0
    %612 = vrot.lane.b32.xlu0 %v174, 64
    %v613 = vpop.permute.xlu0 %612
    %v616 = vsel %vm378, %v470, 0
    %618 = vmatprep.subr.bf16.mxu0 0
    %619 = vmatpush1.bf16.msra.mxu0 %v613
    %620 = vmatprep.subr.bf16.mxu0 0
    %621 = vmatpush1.bf16.msra.mxu0 0
    %622 = vmatprep.subr.bf16.mxu0 0
    %623 = vmatpush1.bf16.msra.mxu0 0
    %624 = vmatprep.subr.bf16.mxu0 0
    %625 = vmatpush1.bf16.msra.mxu0 0
    %626 = vmatprep.subr.bf16.mxu0 0
    %627 = vmatpush1.bf16.msra.mxu0 0
    %628 = vmatprep.subr.bf16.mxu0 0
    %629 = vmatpush1.bf16.msra.mxu0 0
    %630 = vmatprep.subr.bf16.mxu0 0
    %631 = vmatpush1.bf16.msra.mxu0 0
    %632 = vmatprep.subr.bf16.mxu0 0
    %633 = vmatpush1.bf16.msra.mxu0 0
    %634 = vmatprep.subr.bf16.mxu0 0
    %635 = vmatpush1.bf16.msra.mxu0 0
    %636 = vmatprep.subr.bf16.mxu0 0
    %637 = vmatpush1.bf16.msra.mxu0 0
    %638 = vmatprep.subr.bf16.mxu0 0
    %639 = vmatpush1.bf16.msra.mxu0 0
    %640 = vmatprep.subr.bf16.mxu0 0
    %641 = vmatpush1.bf16.msra.mxu0 0
    %642 = vmatprep.subr.bf16.mxu0 0
    %643 = vmatpush1.bf16.msra.mxu0 0
    %644 = vmatprep.subr.bf16.mxu0 0
    %645 = vmatpush1.bf16.msra.mxu0 0
    %646 = vmatprep.subr.bf16.mxu0 0
    %647 = vmatpush1.bf16.msra.mxu0 0
    %648 = vmatprep.subr.bf16.mxu0 0
    %649 = vmatpush1.bf16.msra.mxu0 0
    %650 = vmatprep.mubr.bf16.mxu0 0
    %651 = vmatmul.mubr.bf16.gmra.mrb[0].mxu0 %v616
    %v652 = vpop.f32.mrb[0].mxu0
    %v653 = vadd.f32 0.0, %v652
    %v654 = vpop.f32.mrb[0].mxu0
    %v655 = vpop.f32.mrb[0].mxu0
    %v656 = vadd.f32 0.0, %v655
    %v657 = vpop.f32.mrb[0].mxu0
    %658 = vdwg.mxu0
    %661 = vrot.lane.b32.xlu0 %v559, 8
    %v662 = vpop.permute.xlu0 %661
    %663 = vrot.lane.b32.xlu0 %v562, 8
    %v664 = vpop.permute.xlu0 %663
    %669 = vrot.lane.b32.xlu0 %v606, 16
    %v670 = vpop.permute.xlu0 %669
    %671 = vrot.lane.b32.xlu0 %v609, 16
    %v672 = vpop.permute.xlu0 %671
    %677 = vrot.lane.b32.xlu0 %v653, 24
    %v678 = vpop.permute.xlu0 %677
    %679 = vrot.lane.b32.xlu0 %v656, 24
    %v680 = vpop.permute.xlu0 %679
    %v683 = vsel %vm180, %v512, %v662
    %v684 = vsel %vm180, %v515, %v664
    %v685 = vsel %vm378, %v683, %v670
    %v686 = vsel %vm378, %v684, %v672
    %vm687 = vcmask 195584
    %v688 = vsel %vm687, %v685, %v678
    %v689 = vsel %vm687, %v686, %v680
    %v690 = vpack.c.bf16 %v689, %v688
    %v691 = vld [vmem:[#allocation2] sm:$0xf]
    %v692 = vld [vmem:[#allocation2 + $0x4] sm:$0xf]
    %v693 = vld [vmem:[#allocation2 + $0x8] sm:$0xf]
    %v694 = vld [vmem:[#allocation2 + $0xc] sm:$0xf]
    %v695 = vld [vmem:[%s5] sm:$0x1]
    %v697 = vlaneseq
    %v698 = vshrl.u32 %v697, 7
    %v699 = vsub.s32 0, %v698
    %v700 = vrot.slane %v695, %v699
    %v706 = vunpack.c.l.b16 %v691
    %v707 = vunpack.c.l.b16 %v692
    %v708 = vunpack.c.l.b16 %v693
    %v709 = vunpack.c.l.b16 %v694
    %v710 = vpack.c.b16 %v707, %v706
    %v711 = vpack.c.b16 %v709, %v708
    %v715 = vsel %vm106, %v690, 0
    %717 = vmatprep.subr.bf16.mxu0 0
    %718 = vmatpush1.bf16.msra.mxu0 %v710
    %719 = vmatprep.subr.bf16.mxu0 0
    %720 = vmatpush1.bf16.msra.mxu0 %v711
    %721 = vmatprep.subr.bf16.mxu0 0
    %722 = vmatpush1.bf16.msra.mxu0 0
    %723 = vmatprep.subr.bf16.mxu0 0
    %724 = vmatpush1.bf16.msra.mxu0 0
    %725 = vmatprep.subr.bf16.mxu0 0
    %726 = vmatpush1.bf16.msra.mxu0 0
    %727 = vmatprep.subr.bf16.mxu0 0
    %728 = vmatpush1.bf16.msra.mxu0 0
    %729 = vmatprep.subr.bf16.mxu0 0
    %730 = vmatpush1.bf16.msra.mxu0 0
    %731 = vmatprep.subr.bf16.mxu0 0
    %732 = vmatpush1.bf16.msra.mxu0 0
    %733 = vmatprep.subr.bf16.mxu0 0
    %734 = vmatpush1.bf16.msra.mxu0 0
    %735 = vmatprep.subr.bf16.mxu0 0
    %736 = vmatpush1.bf16.msra.mxu0 0
    %737 = vmatprep.subr.bf16.mxu0 0
    %738 = vmatpush1.bf16.msra.mxu0 0
    %739 = vmatprep.subr.bf16.mxu0 0
    %740 = vmatpush1.bf16.msra.mxu0 0
    %741 = vmatprep.subr.bf16.mxu0 0
    %742 = vmatpush1.bf16.msra.mxu0 0
    %743 = vmatprep.subr.bf16.mxu0 0
    %744 = vmatpush1.bf16.msra.mxu0 0
    %745 = vmatprep.subr.bf16.mxu0 0
    %746 = vmatpush1.bf16.msra.mxu0 0
    %747 = vmatprep.subr.bf16.mxu0 0
    %748 = vmatpush1.bf16.msra.mxu0 0
    %749 = vmatprep.mubr.bf16.mxu0 0
    %750 = vmatmul.mubr.bf16.gmra.mrb[0].mxu0 %v715
    %v751 = vpop.f32.mrb[0].mxu0
    %v752 = vadd.f32 %v700, %v751
    %v753 = vpop.f32.mrb[0].mxu0
    %v754 = vpop.f32.mrb[0].mxu0
    %v755 = vadd.f32 %v700, %v754
    %v756 = vpop.f32.mrb[0].mxu0
    %757 = vdwg.mxu0
    %v758 = vadd.f32 %v80, %v752
    %v759 = vadd.f32 %v81, %v755
    %v760 = vld [vmem:[%s6] sm:$0x1]
    %v761 = vld [vmem:[%s7] sm:$0x1]
    %v762 = vsel %vm106, %v758, 0.0
    %763 = vadd.xlane.f32.xlu0 %v762
    %v764 = vpop.xlane.xlu0 %763
    %v765 = vsel %vm106, %v759, 0.0
    %766 = vadd.xlane.f32.xlu0 %v765
    %v767 = vpop.xlane.xlu0 %766
    %v768 = vrcp.pop 32.0
    %v769 = vmul.f32 %v764, %v768
    %v770 = vmul.f32 %v767, %v768
    %v771 = vsub.f32 %v758, %v769
    %v772 = vsub.f32 %v759, %v770
    %v773 = vmul.f32 %v771, %v771
    %v774 = vmul.f32 %v772, %v772
    %v775 = vsel %vm106, %v773, 0.0
    %776 = vadd.xlane.f32.xlu0 %v775
    %v777 = vpop.xlane.xlu0 %776
    %v778 = vsel %vm106, %v774, 0.0
    %779 = vadd.xlane.f32.xlu0 %v778
    %v780 = vpop.xlane.xlu0 %779
    %v781 = vmul.f32 %v777, %v768
    %v782 = vmul.f32 %v780, %v768
    %v783 = vadd.f32 %v781, 1e-06
    %v784 = vadd.f32 %v782, 1e-06
    %v785 = vrsqrt.pop %v783
    %v786 = vmul.f32 %v783, %v785
    %vm787 = vcmp.eq.f32.partialorder %v783, inf
    %v788 = vsel %vm787, %v783, %v786
    %vm789 = vcmp.eq.f32.partialorder %v783, 0.0
    %v790 = vand.u32 %v783, 2147483648
    %v791 = vsel %vm789, %v790, %v788
    %v792 = vrsqrt.pop %v784
    %v793 = vmul.f32 %v784, %v792
    %vm794 = vcmp.eq.f32.partialorder %v784, inf
    %v795 = vsel %vm794, %v784, %v793
    %vm796 = vcmp.eq.f32.partialorder %v784, 0.0
    %v797 = vand.u32 %v784, 2147483648
    %v798 = vsel %vm796, %v797, %v795
    %v799 = vrcp.pop %v791
    %v800 = vmul.f32 %v771, %v799
    %v801 = vrcp.pop %v798
    %v802 = vmul.f32 %v772, %v801
    %v804 = vlaneseq
    %v805 = vshrl.u32 %v804, 7
    %v806 = vsub.s32 0, %v805
    %v807 = vrot.slane %v760, %v806
    %v809 = vmul.f32 %v800, %v807
    %v810 = vmul.f32 %v802, %v807
    %v812 = vlaneseq
    %v813 = vshrl.u32 %v812, 7
    %v814 = vsub.s32 0, %v813
    %v815 = vrot.slane %v761, %v814
    %v817 = vadd.f32 %v809, %v815
    %v818 = vadd.f32 %v810, %v815
    %v819 = vpack.c.bf16 %v818, %v817
    %v820 = vld [vmem:[#allocation5] sm:$0xf]
    %v821 = vld [vmem:[#allocation5 + $0x4] sm:$0xf]
    %v822 = vld [vmem:[#allocation5 + $0x8] sm:$0xf]
    %v823 = vld [vmem:[#allocation5 + $0xc] sm:$0xf]
    %v824 = vld [vmem:[%s9] sm:$0x1]
    %v826 = vlaneseq
    %v827 = vshrl.u32 %v826, 7
    %v828 = vsub.s32 0, %v827
    %v829 = vrot.slane %v824, %v828
    %v835 = vunpack.c.l.b16 %v820
    %v836 = vunpack.c.l.b16 %v821
    %v837 = vunpack.c.l.b16 %v822
    %v838 = vunpack.c.l.b16 %v823
    %v839 = vpack.c.b16 %v836, %v835
    %v840 = vpack.c.b16 %v838, %v837
    %v844 = vsel %vm106, %v819, 0
    %846 = vmatprep.subr.bf16.mxu0 0
    %847 = vmatpush1.bf16.msra.mxu0 %v839
    %848 = vmatprep.subr.bf16.mxu0 0
    %849 = vmatpush1.bf16.msra.mxu0 %v840
    %850 = vmatprep.subr.bf16.mxu0 0
    %851 = vmatpush1.bf16.msra.mxu0 0
    %852 = vmatprep.subr.bf16.mxu0 0
    %853 = vmatpush1.bf16.msra.mxu0 0
    %854 = vmatprep.subr.bf16.mxu0 0
    %855 = vmatpush1.bf16.msra.mxu0 0
    %856 = vmatprep.subr.bf16.mxu0 0
    %857 = vmatpush1.bf16.msra.mxu0 0
    %858 = vmatprep.subr.bf16.mxu0 0
    %859 = vmatpush1.bf16.msra.mxu0 0
    %860 = vmatprep.subr.bf16.mxu0 0
    %861 = vmatpush1.bf16.msra.mxu0 0
    %862 = vmatprep.subr.bf16.mxu0 0
    %863 = vmatpush1.bf16.msra.mxu0 0
    %864 = vmatprep.subr.bf16.mxu0 0
    %865 = vmatpush1.bf16.msra.mxu0 0
    %866 = vmatprep.subr.bf16.mxu0 0
    %867 = vmatpush1.bf16.msra.mxu0 0
    %868 = vmatprep.subr.bf16.mxu0 0
    %869 = vmatpush1.bf16.msra.mxu0 0
    %870 = vmatprep.subr.bf16.mxu0 0
    %871 = vmatpush1.bf16.msra.mxu0 0
    %872 = vmatprep.subr.bf16.mxu0 0
    %873 = vmatpush1.bf16.msra.mxu0 0
    %874 = vmatprep.subr.bf16.mxu0 0
    %875 = vmatpush1.bf16.msra.mxu0 0
    %876 = vmatprep.subr.bf16.mxu0 0
    %877 = vmatpush1.bf16.msra.mxu0 0
    %878 = vmatprep.mubr.bf16.mxu0 0
    %879 = vmatmul.mubr.bf16.gmra.mrb[0].mxu0 %v844
    %v880 = vpop.f32.mrb[0].mxu0
    %v881 = vadd.f32 %v829, %v880
    %v882 = vpop.f32.mrb[0].mxu0
    %v883 = vpop.f32.mrb[0].mxu0
    %v884 = vadd.f32 %v829, %v883
    %v885 = vpop.f32.mrb[0].mxu0
    %886 = vdwg.mxu0
    %v887 = vmax.f32 %v881, 0.0
    %v888 = vmax.f32 %v884, 0.0
    %v889 = vpack.c.bf16 %v888, %v887
    %v890 = vld [vmem:[%s10] sm:$0xf]
    %v891 = vld [vmem:[%s10 + $0x4] sm:$0xf]
    %v892 = vld [vmem:[%s10 + $0x8] sm:$0xf]
    %v893 = vld [vmem:[%s10 + $0xc] sm:$0xf]
    %v894 = vld [vmem:[%s10 + $0x10] sm:$0xf]
    %v895 = vld [vmem:[%s10 + $0x14] sm:$0xf]
    %v896 = vld [vmem:[%s10 + $0x18] sm:$0xf]
    %v897 = vld [vmem:[%s10 + $0x1c] sm:$0xf]
    %v898 = vld [vmem:[%s11] sm:$0x1]
    %v900 = vlaneseq
    %v901 = vshrl.u32 %v900, 7
    %v902 = vsub.s32 0, %v901
    %v903 = vrot.slane %v898, %v902
    %v913 = vunpack.c.l.b16 %v890
    %v914 = vunpack.c.l.b16 %v891
    %v915 = vunpack.c.l.b16 %v892
    %v916 = vunpack.c.l.b16 %v893
    %v917 = vunpack.c.l.b16 %v894
    %v918 = vunpack.c.l.b16 %v895
    %v919 = vunpack.c.l.b16 %v896
    %v920 = vunpack.c.l.b16 %v897
    %v921 = vpack.c.b16 %v914, %v913
    %v922 = vpack.c.b16 %v916, %v915
    %v923 = vpack.c.b16 %v918, %v917
    %v924 = vpack.c.b16 %v920, %v919
    %vm929 = vcmask 523264
    %v931 = vsel %vm929, %v889, 0
    %933 = vmatprep.subr.bf16.mxu0 0
    %934 = vmatpush1.bf16.msra.mxu0 %v921
    %935 = vmatprep.subr.bf16.mxu0 0
    %936 = vmatpush1.bf16.msra.mxu0 %v922
    %937 = vmatprep.subr.bf16.mxu0 0
    %938 = vmatpush1.bf16.msra.mxu0 %v923
    %939 = vmatprep.subr.bf16.mxu0 0
    %940 = vmatpush1.bf16.msra.mxu0 %v924
    %941 = vmatprep.subr.bf16.mxu0 0
    %942 = vmatpush1.bf16.msra.mxu0 0
    %943 = vmatprep.subr.bf16.mxu0 0
    %944 = vmatpush1.bf16.msra.mxu0 0
    %945 = vmatprep.subr.bf16.mxu0 0
    %946 = vmatpush1.bf16.msra.mxu0 0
    %947 = vmatprep.subr.bf16.mxu0 0
    %948 = vmatpush1.bf16.msra.mxu0 0
    %949 = vmatprep.subr.bf16.mxu0 0
    %950 = vmatpush1.bf16.msra.mxu0 0
    %951 = vmatprep.subr.bf16.mxu0 0
    %952 = vmatpush1.bf16.msra.mxu0 0
    %953 = vmatprep.subr.bf16.mxu0 0
    %954 = vmatpush1.bf16.msra.mxu0 0
    %955 = vmatprep.subr.bf16.mxu0 0
    %956 = vmatpush1.bf16.msra.mxu0 0
    %957 = vmatprep.subr.bf16.mxu0 0
    %958 = vmatpush1.bf16.msra.mxu0 0
    %959 = vmatprep.subr.bf16.mxu0 0
    %960 = vmatpush1.bf16.msra.mxu0 0
    %961 = vmatprep.subr.bf16.mxu0 0
    %962 = vmatpush1.bf16.msra.mxu0 0
    %963 = vmatprep.subr.bf16.mxu0 0
    %964 = vmatpush1.bf16.msra.mxu0 0
    %965 = vmatprep.mubr.bf16.mxu0 0
    %966 = vmatmul.mubr.bf16.gmra.mrb[0].mxu0 %v931
    %v967 = vpop.f32.mrb[0].mxu0
    %v968 = vadd.f32 %v903, %v967
    %v969 = vpop.f32.mrb[0].mxu0
    %v970 = vpop.f32.mrb[0].mxu0
    %v971 = vadd.f32 %v903, %v970
    %v972 = vpop.f32.mrb[0].mxu0
    %973 = vdwg.mxu0
    %v974 = vadd.f32 %v817, %v968
    %v975 = vadd.f32 %v818, %v971
    %v976 = vld [vmem:[%s12] sm:$0x1]
    %v977 = vld [vmem:[%s13] sm:$0x1]
    %v978 = vsel %vm106, %v974, 0.0
    %979 = vadd.xlane.f32.xlu0 %v978
    %v980 = vpop.xlane.xlu0 %979
    %v981 = vsel %vm106, %v975, 0.0
    %982 = vadd.xlane.f32.xlu0 %v981
    %v983 = vpop.xlane.xlu0 %982
    %v984 = vmul.f32 %v980, %v768
    %v985 = vmul.f32 %v983, %v768
    %v986 = vsub.f32 %v974, %v984
    %v987 = vsub.f32 %v975, %v985
    %v988 = vmul.f32 %v986, %v986
    %v989 = vmul.f32 %v987, %v987
    %v990 = vsel %vm106, %v988, 0.0
    %991 = vadd.xlane.f32.xlu0 %v990
    %v992 = vpop.xlane.xlu0 %991
    %v993 = vsel %vm106, %v989, 0.0
    %994 = vadd.xlane.f32.xlu0 %v993
    %v995 = vpop.xlane.xlu0 %994
    %v996 = vmul.f32 %v992, %v768
    %v997 = vmul.f32 %v995, %v768
    %v998 = vadd.f32 %v996, 1e-06
    %v999 = vadd.f32 %v997, 1e-06
    %v1000 = vrsqrt.pop %v998
    %v1001 = vmul.f32 %v998, %v1000
    %vm1002 = vcmp.eq.f32.partialorder %v998, inf
    %v1003 = vsel %vm1002, %v998, %v1001
    %vm1004 = vcmp.eq.f32.partialorder %v998, 0.0
    %v1005 = vand.u32 %v998, 2147483648
    %v1006 = vsel %vm1004, %v1005, %v1003
    %v1007 = vrsqrt.pop %v999
    %v1008 = vmul.f32 %v999, %v1007
    %vm1009 = vcmp.eq.f32.partialorder %v999, inf
    %v1010 = vsel %vm1009, %v999, %v1008
    %vm1011 = vcmp.eq.f32.partialorder %v999, 0.0
    %v1012 = vand.u32 %v999, 2147483648
    %v1013 = vsel %vm1011, %v1012, %v1010
    %v1014 = vrcp.pop %v1006
    %v1015 = vmul.f32 %v986, %v1014
    %v1016 = vrcp.pop %v1013
    %v1017 = vmul.f32 %v987, %v1016
    %v1019 = vlaneseq
    %v1020 = vshrl.u32 %v1019, 7
    %v1021 = vsub.s32 0, %v1020
    %v1022 = vrot.slane %v976, %v1021
    %v1024 = vmul.f32 %v1015, %v1022
    %v1025 = vmul.f32 %v1017, %v1022
    %v1027 = vlaneseq
    %v1028 = vshrl.u32 %v1027, 7
    %v1029 = vsub.s32 0, %v1028
    %v1030 = vrot.slane %v977, %v1029
    %v1032 = vadd.f32 %v1024, %v1030
    %v1033 = vadd.f32 %v1025, %v1030
    %v1035 = vrot.slane %v1032, 1
    %1036 = vrot.lane.b32.xlu0 %v1035, 32
    %v1037 = vpop.permute.xlu0 %1036
    %v1039 = vrot.slane %v1032, 2
    %1040 = vrot.lane.b32.xlu0 %v1039, 64
    %v1041 = vpop.permute.xlu0 %1040
    %v1043 = vrot.slane %v1032, 3
    %1044 = vrot.lane.b32.xlu0 %v1043, 96
    %v1045 = vpop.permute.xlu0 %1044
    %v1047 = vsel %vm106, %v1032, %v1037
    %v1048 = vsel %vm929, %v1047, %v1041
    %vm1049 = vcmask 785408
    %v1050 = vsel %vm1049, %v1048, %v1045
    %v1052 = vrot.slane %v1033, 1
    %1053 = vrot.lane.b32.xlu0 %v1052, 32
    %v1054 = vpop.permute.xlu0 %1053
    %v1056 = vrot.slane %v1033, 2
    %1057 = vrot.lane.b32.xlu0 %v1056, 64
    %v1058 = vpop.permute.xlu0 %1057
    %v1060 = vrot.slane %v1033, 3
    %1061 = vrot.lane.b32.xlu0 %v1060, 96
    %v1062 = vpop.permute.xlu0 %1061
    %v1064 = vsel %vm106, %v1033, %v1054
    %v1065 = vsel %vm929, %v1064, %v1058
    %v1066 = vsel %vm1049, %v1065, %v1062
    %v1068 = vrot.slane %v1050, 3
    %v1071 = vrot.slane %v1066, 6
    %v1073 = vrot.slane %v1066, 1
    %vm1075 = vcmask 1040384
    %v1076 = vsel %vm1075, %v1050, %v1068
    %vm1077 = vcmask 1041408
    %v1078 = vsel %vm1077, %v1076, %v1071
    %vm1079 = vcmask 1042432
    %v1080 = vsel %vm1079, %v1078, %v1073
    %1081 = vst [vmem:[#allocation7] sm:$0xf] %v1080
    %v1082 = vsel %vm378, %v452, 0.0
    %v1083 = vsel %vm378, %v456, 0.0
    %v1084 = vadd.f32 %v1082, %v1083
    %v1085 = vsel %vm378, %v460, 0.0
    %v1086 = vadd.f32 %v1084, %v1085
    %v1087 = vsel %vm378, %v464, 0.0
    %v1088 = vadd.f32 %v1086, %v1087
    %v1089 = vsel %vm378, %v454, 0.0
    %v1090 = vsel %vm378, %v458, 0.0
    %v1091 = vadd.f32 %v1089, %v1090
    %v1092 = vsel %vm378, %v462, 0.0
    %v1093 = vadd.f32 %v1091, %v1092
    %v1094 = vsel %vm378, %v466, 0.0
    %v1095 = vadd.f32 %v1093, %v1094
    %v1096 = vrcp.pop 4.0
    %v1097 = vmul.f32 %v1088, %v1096
    %v1098 = vmul.f32 %v1095, %v1096
    %v1100 = vrot.slane %v1097, 1
    %1101 = vrot.lane.b32.xlu0 %v1100, 8
    %v1102 = vpop.permute.xlu0 %1101
    %v1104 = vrot.slane %v1097, 2
    %1105 = vrot.lane.b32.xlu0 %v1104, 16
    %v1106 = vpop.permute.xlu0 %1105
    %v1108 = vrot.slane %v1097, 3
    %1109 = vrot.lane.b32.xlu0 %v1108, 24
    %v1110 = vpop.permute.xlu0 %1109
    %v1112 = vrot.slane %v1097, 4
    %1113 = vrot.lane.b32.xlu0 %v1112, 32
    %v1114 = vpop.permute.xlu0 %1113
    %v1116 = vrot.slane %v1097, 5
    %1117 = vrot.lane.b32.xlu0 %v1116, 40
    %v1118 = vpop.permute.xlu0 %1117
    %v1120 = vrot.slane %v1097, 6
    %1121 = vrot.lane.b32.xlu0 %v1120, 48
    %v1122 = vpop.permute.xlu0 %1121
    %v1124 = vrot.slane %v1097, 7
    %1125 = vrot.lane.b32.xlu0 %v1124, 56
    %v1126 = vpop.permute.xlu0 %1125
    %v1128 = vsel %vm180, %v1097, %v1102
    %v1129 = vsel %vm378, %v1128, %v1106
    %v1130 = vsel %vm687, %v1129, %v1110
    %v1131 = vsel %vm106, %v1130, %v1114
    %vm1132 = vcmask 326656
    %v1133 = vsel %vm1132, %v1131, %v1118
    %vm1134 = vcmask 392192
    %v1135 = vsel %vm1134, %v1133, %v1122
    %vm1136 = vcmask 457728
    %v1137 = vsel %vm1136, %v1135, %v1126
    %1139 = vrot.lane.b32.xlu0 %v1098, 120
    %v1140 = vpop.permute.xlu0 %1139
    %v1142 = vrot.slane %v1098, 1
    %v1144 = vrot.slane %v1098, 2
    %1145 = vrot.lane.b32.xlu0 %v1144, 8
    %v1146 = vpop.permute.xlu0 %1145
    %v1148 = vrot.slane %v1098, 3
    %1149 = vrot.lane.b32.xlu0 %v1148, 16
    %v1150 = vpop.permute.xlu0 %1149
    %v1152 = vrot.slane %v1098, 4
    %1153 = vrot.lane.b32.xlu0 %v1152, 24
    %v1154 = vpop.permute.xlu0 %1153
    %v1156 = vrot.slane %v1098, 5
    %1157 = vrot.lane.b32.xlu0 %v1156, 32
    %v1158 = vpop.permute.xlu0 %1157
    %v1160 = vrot.slane %v1098, 6
    %1161 = vrot.lane.b32.xlu0 %v1160, 40
    %v1162 = vpop.permute.xlu0 %1161
    %v1164 = vrot.slane %v1098, 7
    %1165 = vrot.lane.b32.xlu0 %v1164, 48
    %v1166 = vpop.permute.xlu0 %1165
    %v1168 = vsel %vm180, %v1140, %v1142
    %v1169 = vsel %vm378, %v1168, %v1146
    %v1170 = vsel %vm687, %v1169, %v1150
    %v1171 = vsel %vm106, %v1170, %v1154
    %v1172 = vsel %vm1132, %v1171, %v1158
    %v1173 = vsel %vm1134, %v1172, %v1162
    %v1174 = vsel %vm1136, %v1173, %v1166
    %1176 = vrot.lane.b32.xlu0 %v1174, 64
    %v1177 = vpop.permute.xlu0 %1176
    %v1179 = vsel %vm929, %v1137, %v1177
    %1180 = vst [vmem:[#allocation8] sm:$0x1] %v1179
    // Predicated region
    $region66: #{tpu_custom_call.1} parent=1 // pred_check
      _
    $region67: #{tpu_custom_call.1} parent=1 // pred_check_branch
      %1182 = sbr.rel (0) target = $region69
    $region68: #{tpu_custom_call.1} parent=1 // pred_region
      %s1184 = ssub.s32 64, 64
      %1185 = vsyncadd [#allocation4], %s1184
      %s1187 = sshll.u32 [#allocation7], 4
      %s1188 = int_to_ptr.vmem [resolvable:$true] %s1187
      %1190 = dma.vmem_to_hbm [thread:$0]  %s1188, 64, %s14, [#allocation4]
    $region69: #{tpu_custom_call.1} parent=1 // pred_fallthru
      _
    // Predicated region
    $region70: #{tpu_custom_call.1} parent=1 // pred_check
      _
    $region71: #{tpu_custom_call.1} parent=1 // pred_check_branch
      %1192 = sbr.rel (0) target = $region73
    $region72: #{tpu_custom_call.1} parent=1 // pred_region
      %s1194 = ssub.s32 16, 16
      %1195 = vsyncadd [#allocation9], %s1194
      %s1197 = sshll.u32 [#allocation8], 4
      %s1198 = int_to_ptr.vmem [resolvable:$true] %s1197
      %1200 = dma.vmem_to_hbm [thread:$0]  %s1198, 16, %s15, [#allocation9]
    $region73: #{tpu_custom_call.1} parent=1 // pred_fallthru
      _
    // Predicated region
    $region74: #{tpu_custom_call.1} parent=1 // pred_check
      _
    $region75: #{tpu_custom_call.1} parent=1 // pred_check_branch
      %1202 = sbr.rel (0) target = $region77
    $region76: #{tpu_custom_call.1} parent=1 // pred_region
      %1203 = dma.done [#allocation4], 64
    $region77: #{tpu_custom_call.1} parent=1 // pred_fallthru
      _
    // Predicated region
    $region78: #{tpu_custom_call.1} parent=1 // pred_check
      _
    $region79: #{tpu_custom_call.1} parent=1 // pred_check_branch
      %1205 = sbr.rel (0) target = $region81
    $region80: #{tpu_custom_call.1} parent=1 // pred_region
      %1206 = dma.done [#allocation9], 16
    $region81: #{tpu_custom_call.1} parent=1 // pred_fallthru
      _
    %1207 = vsyncpa [#allocation3], 1
    %1208 = vsyncpa [#allocation6], 1
    %1209 = vsyncpa [#allocation4], 1
    %1210 = vsyncpa [#allocation9], 1

</llo_original>
